<compile_context>
chip_gen: v6e
topology: v6e:2x2x1
jax: 0.10.0
libtpu: 0.0.40
codegen_flags: <defaults>
</compile_context>

<pallas_src>
import functools

import jax
import jax.numpy as jnp
from jax.experimental import pallas as pl
from jax.experimental.pallas import tpu as pltpu


# ---------------------------------------------------------------------------
# Activation
# ---------------------------------------------------------------------------
def swish(v):                       # reference (XLA) version
    return v * jax.nn.sigmoid(v)


def _swish(v):                      # kernel version: divide on the EUP slot
    return v * pl.reciprocal(1.0 + jnp.exp(-v), approx=True)


# ---------------------------------------------------------------------------
# Small helpers
# ---------------------------------------------------------------------------
def _round_up(n, m):
    return ((n + m - 1) // m) * m


def _pad_rows(a, n_pad):
    n = a.shape[0]
    if n_pad == n:
        return a
    pad = [(0, n_pad - n)] + [(0, 0)] * (a.ndim - 1)
    return jnp.pad(a, pad)


def _full_spec(a):
    nd = a.ndim
    return pl.BlockSpec(a.shape, lambda *_, nd=nd: (0,) * nd)


def _residual_stack(h, res_w_ref, res_b_ref, start, n):
    """Statically-unrolled residual MLP pairs from the packed weight stack."""
    for i in range(n):
        j = start + 2 * i
        u = _swish(jnp.dot(h.astype(jnp.bfloat16), res_w_ref[j],
                           preferred_element_type=jnp.float32) + res_b_ref[j])
        u = _swish(jnp.dot(u.astype(jnp.bfloat16), res_w_ref[j + 1],
                           preferred_element_type=jnp.float32) + res_b_ref[j + 1])
        h = h + u
    return h


# ---------------------------------------------------------------------------
# Trace-time parameter folding (exact algebra) + bf16 weight casting
# ---------------------------------------------------------------------------
def fold_params(p):
    bf = jnp.bfloat16
    nb = p["wb1"].shape[0]
    na = p["wa1"].shape[0]
    H = p["w_lin"].shape[0]

    def pack(w1, b1, w2, b2):
        n = w1.shape[0]
        ws = [w for i in range(n) for w in (w1[i], w2[i])]
        bs = [b for i in range(n) for b in (b1[i], b2[i])]
        return ws, bs

    wsb, bsb = pack(p["wb1"], p["bb1"], p["wb2"], p["bb2"])
    wsa, bsa = pack(p["wa1"], p["ba1"], p["wa2"], p["ba2"])
    if wsb + wsa:
        res_w = jnp.stack(wsb + wsa).astype(bf)        # [2*(nb+na), H, H]
        res_b = jnp.stack(bsb + bsa)                   # [2*(nb+na), 1, H] f32
    else:
        res_w = jnp.zeros((0, H, H), bf)
        res_b = jnp.zeros((0, 1, H), jnp.float32)

    return {
        "w_cat": jnp.concatenate([p["w_ji"], p["w_kj"]], 1).astype(bf),  # [H,2H]
        "b_cat": jnp.concatenate([p["b_ji"], p["b_kj"]], 1),             # [1,2H]
        "w_rbf": (p["w_rbf1"] @ p["w_rbf2"]).astype(bf),                 # [NR,H]
        "w_sbf": (p["w_sbf1"] @ p["w_sbf2"]).astype(bf),                 # [NS*NR,I]
        "w_down": p["w_down"].astype(bf),
        "w_up": p["w_up"].astype(bf),
        "res_w": res_w, "res_b": res_b,
        "w_lin": p["w_lin"].astype(bf),
        "b_lin": p["b_lin"],
        "nb": nb, "na": na,
    }


# ---------------------------------------------------------------------------
# Generation-aware VMEM budget (v5e/v6e: 128 MiB physical, v7x: 64 MiB)
# ---------------------------------------------------------------------------
def _vmem_capacity_bytes():
    try:
        return int(pltpu.get_tpu_info().vmem_capacity_bytes)
    except Exception:
        return 64 * 1024 * 1024          # conservative fallback: v7x physical


def _fused_vmem_budget():
    cap = _vmem_capacity_bytes()
    budget = min(int(0.70 * cap), 100 * 1024 * 1024)   # v5e/v6e ~90 MiB, v7x ~45 MiB
    limit = min(int(0.90 * cap), 112 * 1024 * 1024)    # scoped-VMEM limit to request
    return budget, limit


def _fused_vmem_bytes(E_pad, T_pad, H, NR, S, I, n_res):
    f32, b16 = 4, 2
    io = f32 * (E_pad * (2 * H + NR) + T_pad * (S + 2))
    w = (b16 * (2 * H * H + NR * H + H * I + S * I + I * H + n_res * H * H + H * H)
         + f32 * (2 * H + n_res * H + 2 * H))
    inter = (f32 * E_pad * (2 * H + H + 2 * I + H)     # jikj, x_kj, down/agg, h
             + f32 * T_pad * 2 * I                     # gathered, sbf projection
             + b16 * 2 * T_pad * E_pad)                # bf16 one-hot gather/scatter
    return 2 * (io + w + inter)                        # 2x headroom for relayouts


# ---------------------------------------------------------------------------
# FUSED path: whole block in one pallas_call (everything VMEM-resident)
# ---------------------------------------------------------------------------
def fused_kernel(H, nb, na,
                 x_ref, rbf_ref, sbf_ref, idx_kj_ref, idx_ji_ref,
                 w_cat_ref, b_cat_ref, w_rbf_ref, w_down_ref, w_sbf_ref,
                 w_up_ref, res_w_ref, res_b_ref, w_lin_ref, b_lin_ref,
                 out_ref):
    bf = jnp.bfloat16
    E = x_ref.shape[0]
    T = sbf_ref.shape[0]

    x = x_ref[...]
    jikj = _swish(jnp.dot(x.astype(bf), w_cat_ref[...],
                          preferred_element_type=jnp.float32) + b_cat_ref[...])
    x_ji = jikj[:, :H]
    rbf_p = jnp.dot(rbf_ref[...].astype(bf), w_rbf_ref[...],
                    preferred_element_type=jnp.float32)
    x_kj = jikj[:, H:] * rbf_p
    x_kj_down = _swish(jnp.dot(x_kj.astype(bf), w_down_ref[...],
                               preferred_element_type=jnp.float32))        # [E, I]

    # Triplet gather as a one-hot MXU matmul (exact 0/1 values in bf16).
    # TODO(synk): chunk this contraction over E for very large graphs.
    g_oh = (jax.lax.broadcasted_iota(jnp.int32, (T, E), 1)
            == idx_kj_ref[...]).astype(bf)                                 # [T, E]
    xg = jnp.dot(g_oh, x_kj_down.astype(bf),
                 preferred_element_type=jnp.float32)                       # [T, I]
    sbf_p = jnp.dot(sbf_ref[...].astype(bf), w_sbf_ref[...],
                    preferred_element_type=jnp.float32)
    tt = (xg * sbf_p).astype(bf)                                           # [T, I]

    # Scatter-add over idx_ji as a one-hot matmul (duplicates summed exactly).
    s_oh = (jax.lax.broadcasted_iota(jnp.int32, (E, T), 0)
            == idx_ji_ref[...]).astype(bf)                                 # [E, T]
    x_agg = jnp.dot(s_oh, tt, preferred_element_type=jnp.float32)          # [E, I]

    x_kj_up = _swish(jnp.dot(x_agg.astype(bf), w_up_ref[...],
                             preferred_element_type=jnp.float32))
    h = x_ji + x_kj_up
    h = _residual_stack(h, res_w_ref, res_b_ref, 0, nb)
    h = _swish(jnp.dot(h.astype(bf), w_lin_ref[...],
                       preferred_element_type=jnp.float32) + b_lin_ref[...]) + x
    h = _residual_stack(h, res_w_ref, res_b_ref, 2 * nb, na)
    out_ref[...] = h


def _fused_forward(x, rbf, sbf, idx_kj, idx_ji, fp, *, vmem_limit):
    E, H = x.shape
    T = sbf.shape[0]
    E_pad = _round_up(E, 8)
    T_pad = _round_up(T, 8)

    x_p = _pad_rows(x, E_pad)
    rbf_p = _pad_rows(rbf, E_pad)          # zero pad => pad rows never contribute
    sbf_p = _pad_rows(sbf, T_pad)
    idx_kj_p = _pad_rows(idx_kj.astype(jnp.int32).reshape(T, 1), T_pad)
    idx_ji_p = _pad_rows(idx_ji.astype(jnp.int32).reshape(T, 1), T_pad).reshape(1, T_pad)

    args = (x_p, rbf_p, sbf_p, idx_kj_p, idx_ji_p,
            fp["w_cat"], fp["b_cat"], fp["w_rbf"], fp["w_down"], fp["w_sbf"],
            fp["w_up"], fp["res_w"], fp["res_b"], fp["w_lin"], fp["b_lin"])

    out = pl.pallas_call(
        functools.partial(fused_kernel, H, fp["nb"], fp["na"]),
        grid=(1,),
        in_specs=[_full_spec(a) for a in args],
        out_specs=pl.BlockSpec((E_pad, H), lambda i: (0, 0)),
        out_shape=jax.ShapeDtypeStruct((E_pad, H), jnp.float32),
        compiler_params=pltpu.CompilerParams(vmem_limit_bytes=int(vmem_limit)),
        # TODO(synk): add a 2-wide "parallel" leading grid axis over E so both
        #             v7x TensorCores get work on the fused path.
    )(*args)
    return out[:E]


# ---------------------------------------------------------------------------
# TILED path: 3 pallas_calls, large row tiles, NO XLA gather/scatter glue
# ---------------------------------------------------------------------------
_TILE_E = 1024    # edge-row tile (review: 256 -> 1024)
_TILE_T = 2048    # triplet-row tile (review: 512 -> 2048)


def _pick_tile(n, target):
    return min(target, _round_up(max(n, 1), 8))


# ---- kernel 1: per-edge pre-projections, one packed lane-dense output -------
def edge_pre_kernel(x_ref, rbf_ref, w_cat_ref, b_cat_ref, w_rbf_ref, w_down_ref,
                    out_ref):
    bf = jnp.bfloat16
    H = x_ref.shape[1]
    jikj = _swish(jnp.dot(x_ref[...].astype(bf), w_cat_ref[...],
                          preferred_element_type=jnp.float32) + b_cat_ref[...])
    rbf_p = jnp.dot(rbf_ref[...].astype(bf), w_rbf_ref[...],
                    preferred_element_type=jnp.float32)
    x_kj = jikj[:, H:] * rbf_p
    x_kj_down = _swish(jnp.dot(x_kj.astype(bf), w_down_ref[...],
                               preferred_element_type=jnp.float32))
    out_ref[:, :H] = jikj[:, :H]          # packed: [x_ji ++ x_kj_down]
    out_ref[:, H:] = x_kj_down


def edge_pre(x, rbf, fp, *, tile_e):
    E_pad, H = x.shape
    NR = rbf.shape[1]
    I = fp["w_down"].shape[1]
    row = lambda i: (i, 0)
    full = lambda i: (0, 0)
    return pl.pallas_call(
        edge_pre_kernel,
        grid=(E_pad // tile_e,),
        in_specs=[
            pl.BlockSpec((tile_e, H), row),
            pl.BlockSpec((tile_e, NR), row),
            pl.BlockSpec((H, 2 * H), full),
            pl.BlockSpec((1, 2 * H), full),
            pl.BlockSpec((NR, H), full),
            pl.BlockSpec((H, I), full),
        ],
        out_specs=pl.BlockSpec((tile_e, H + I), row),
        out_shape=jax.ShapeDtypeStruct((E_pad, H + I), jnp.float32),
        compiler_params=pltpu.CompilerParams(dimension_semantics=("parallel",)),
    )(x, rbf, fp["w_cat"], fp["b_cat"], fp["w_rbf"], fp["w_down"])


# ---- kernel 2: fused triplet gather + sbf projection + segment-sum scatter ---
def gather_sbf_scatter_kernel(H, sbf_ref, idx_kj_ref, idx_ji_ref, pre_ref,
                              w_sbf_ref, xagg_ref):
    bf = jnp.bfloat16
    t = pl.program_id(0)

    @pl.when(t == 0)
    def _():
        xagg_ref[...] = jnp.zeros_like(xagg_ref)

    E_pad = pre_ref.shape[0]
    Tt = sbf_ref.shape[0]
    x_kj_down = pre_ref[...][:, H:].astype(bf)                     # resident [E_pad, I]

    # Gather x_kj_down[idx_kj] for this T tile: one-hot MXU matmul.
    # TODO(synk): for very large E, replace with a sorted-segment /
    #             scalar-prefetch scatter (one-hot work is O(T*E)).
    g_oh = (jax.lax.broadcasted_iota(jnp.int32, (Tt, E_pad), 1)
            == idx_kj_ref[...]).astype(bf)                         # [Tt, E_pad]
    xg = jnp.dot(g_oh, x_kj_down, preferred_element_type=jnp.float32)   # [Tt, I]
    sbf_p = jnp.dot(sbf_ref[...].astype(bf), w_sbf_ref[...],
                    preferred_element_type=jnp.float32)            # [Tt, I]
    tt = (xg * sbf_p).astype(bf)

    # Scatter-add into the resident accumulator (duplicates summed by the MXU).
    s_oh = (jax.lax.broadcasted_iota(jnp.int32, (E_pad, Tt), 0)
            == idx_ji_ref[...]).astype(bf)                         # [E_pad, Tt]
    xagg_ref[...] += jnp.dot(s_oh, tt, preferred_element_type=jnp.float32)


def gather_sbf_scatter(sbf, idx_kj_col, idx_ji_row, pre, fp, *, tile_t, H):
    T_pad, S = sbf.shape
    E_pad, HI = pre.shape
    I = fp["w_sbf"].shape[1]
    return pl.pallas_call(
        functools.partial(gather_sbf_scatter_kernel, H),
        grid=(T_pad // tile_t,),
        in_specs=[
            pl.BlockSpec((tile_t, S), lambda t: (t, 0)),
            pl.BlockSpec((tile_t, 1), lambda t: (t, 0)),
            pl.BlockSpec((1, tile_t), lambda t: (0, t)),
            pl.BlockSpec((E_pad, HI), lambda t: (0, 0)),           # VMEM-resident
            pl.BlockSpec((S, I), lambda t: (0, 0)),
        ],
        out_specs=pl.BlockSpec((E_pad, I), lambda t: (0, 0)),      # resident accumulator
        out_shape=jax.ShapeDtypeStruct((E_pad, I), jnp.float32),
        compiler_params=pltpu.CompilerParams(dimension_semantics=("arbitrary",)),
    )(sbf, idx_kj_col, idx_ji_row, pre, fp["w_sbf"])


# ---- kernel 3: up-projection + residual stacks + skip ------------------------
def edge_post_kernel(H, nb, na, x_ref, pre_ref, xagg_ref, w_up_ref,
                     res_w_ref, res_b_ref, w_lin_ref, b_lin_ref, out_ref):
    bf = jnp.bfloat16
    x = x_ref[...]
    x_ji = pre_ref[...][:, :H]
    x_kj_up = _swish(jnp.dot(xagg_ref[...].astype(bf), w_up_ref[...],
                             preferred_element_type=jnp.float32))
    h = x_ji + x_kj_up
    h = _residual_stack(h, res_w_ref, res_b_ref, 0, nb)
    h = _swish(jnp.dot(h.astype(bf), w_lin_ref[...],
                       preferred_element_type=jnp.float32) + b_lin_ref[...]) + x
    h = _residual_stack(h, res_w_ref, res_b_ref, 2 * nb, na)
    out_ref[...] = h


def edge_post(x, pre, x_agg, fp, *, tile_e):
    E_pad, H = x.shape
    HI = pre.shape[1]
    I = x_agg.shape[1]
    L = fp["res_w"].shape[0]
    row = lambda i: (i, 0)
    full2 = lambda i: (0, 0)
    full3 = lambda i: (0, 0, 0)
    return pl.pallas_call(
        functools.partial(edge_post_kernel, H, fp["nb"], fp["na"]),
        grid=(E_pad // tile_e,),
        in_specs=[
            pl.BlockSpec((tile_e, H), row),        # x
            pl.BlockSpec((tile_e, HI), row),       # packed [x_ji ++ x_kj_down]
            pl.BlockSpec((tile_e, I), row),        # x_agg
            pl.BlockSpec((I, H), full2),           # w_up (bf16)
            pl.BlockSpec((L, H, H), full3),        # packed residual weights (bf16)
            pl.BlockSpec((L, 1, H), full3),        # packed residual biases (f32)
            pl.BlockSpec((H, H), full2),           # w_lin (bf16)
            pl.BlockSpec((1, H), full2),           # b_lin
        ],
        out_specs=pl.BlockSpec((tile_e, H), row),
        out_shape=jax.ShapeDtypeStruct((E_pad, H), jnp.float32),
        compiler_params=pltpu.CompilerParams(dimension_semantics=("parallel",)),
    )(x, pre, x_agg, fp["w_up"], fp["res_w"], fp["res_b"], fp["w_lin"], fp["b_lin"])


def _tiled_forward(x, rbf, sbf, idx_kj, idx_ji, fp, *, tile_e=None, tile_t=None):
    E, H = x.shape
    T = sbf.shape[0]
    te = tile_e if tile_e is not None else _pick_tile(E, _TILE_E)
    tt = tile_t if tile_t is not None else _pick_tile(T, _TILE_T)
    E_pad = _round_up(E, te)
    T_pad = _round_up(T, tt)

    x_p = _pad_rows(x, E_pad)
    rbf_p = _pad_rows(rbf, E_pad)
    sbf_p = _pad_rows(sbf, T_pad)          # zero pad => padded triplets contribute 0
    idx_kj_col = _pad_rows(idx_kj.astype(jnp.int32).reshape(T, 1), T_pad)
    idx_ji_row = _pad_rows(idx_ji.astype(jnp.int32).reshape(T, 1), T_pad).reshape(1, T_pad)

    pre = edge_pre(x_p, rbf_p, fp, tile_e=te)                       # [E_pad, H+I]
    x_agg = gather_sbf_scatter(sbf_p, idx_kj_col, idx_ji_row, pre, fp,
                               tile_t=tt, H=H)                      # [E_pad, I]
    h = edge_post(x_p, pre, x_agg, fp, tile_e=te)
    return h[:E]


# ---------------------------------------------------------------------------
# Full InteractionPPBlock forward
# ---------------------------------------------------------------------------
def interaction_pp_block(x, rbf, sbf, idx_kj, idx_ji, params, *,
                         force_path=None, tile_e=None, tile_t=None):
    fp = fold_params(params)
    E, H = x.shape
    NR = rbf.shape[1]
    T, S = sbf.shape
    I = fp["w_up"].shape[0]
    n_res = fp["res_w"].shape[0]

    budget, vmem_limit = _fused_vmem_budget()
    est = _fused_vmem_bytes(_round_up(E, 8), _round_up(T, 8), H, NR, S, I, n_res)
    fits = est <= budget

    use_fused = fits
    if force_path == "tiled":
        use_fused = False
    elif force_path == "fused":
        use_fused = fits        # guarded: never force a fused path that won't fit

    if use_fused:
        return _fused_forward(x, rbf, sbf, idx_kj, idx_ji, fp, vmem_limit=vmem_limit)
    return _tiled_forward(x, rbf, sbf, idx_kj, idx_ji, fp, tile_e=tile_e, tile_t=tile_t)


# ---------------------------------------------------------------------------
# Pure-JAX reference (mirrors the PyTorch forward exactly, no folding, f32)
# ---------------------------------------------------------------------------
def reference_forward(x, rbf, sbf, idx_kj, idx_ji, p):
    x_ji = swish(x @ p["w_ji"] + p["b_ji"])
    x_kj = swish(x @ p["w_kj"] + p["b_kj"])
    rbf2 = (rbf @ p["w_rbf1"]) @ p["w_rbf2"]
    x_kj = x_kj * rbf2
    x_kj = swish(x_kj @ p["w_down"])
    sbf2 = (sbf @ p["w_sbf1"]) @ p["w_sbf2"]
    t = x_kj[idx_kj] * sbf2
    x_agg = jax.ops.segment_sum(t, idx_ji, num_segments=x.shape[0])
    x_kj_up = swish(x_agg @ p["w_up"])
    h = x_ji + x_kj_up
    for i in range(p["wb1"].shape[0]):
        u = swish(h @ p["wb1"][i] + p["bb1"][i])
        u = swish(u @ p["wb2"][i] + p["bb2"][i])
        h = h + u
    h = swish(h @ p["w_lin"] + p["b_lin"]) + x
    for i in range(p["wa1"].shape[0]):
        u = swish(h @ p["wa1"][i] + p["ba1"][i])
        u = swish(u @ p["wa2"][i] + p["ba2"][i])
        h = h + u
    return h


# ---------------------------------------------------------------------------
# Deterministic parameter init (glorot-style normal; weights stored [in, out])
# ---------------------------------------------------------------------------
def glorot(key, shape):
    fan_in, fan_out = shape[-2], shape[-1]
    std = (2.0 / (fan_in + fan_out)) ** 0.5
    return std * jax.random.normal(key, shape, dtype=jnp.float32)


def init_params(key, H, I, B, NS, NR, nb, na):
    ks = jax.random.split(key, 16)
    return {
        "w_rbf1": glorot(ks[0], (NR, B)),
        "w_rbf2": glorot(ks[1], (B, H)),
        "w_sbf1": glorot(ks[2], (NS * NR, B)),
        "w_sbf2": glorot(ks[3], (B, I)),
        "w_kj": glorot(ks[4], (H, H)),
        "b_kj": jnp.zeros((1, H), jnp.float32),
        "w_ji": glorot(ks[5], (H, H)),
        "b_ji": jnp.zeros((1, H), jnp.float32),
        "w_down": glorot(ks[6], (H, I)),
        "w_up": glorot(ks[7], (I, H)),
        "wb1": glorot(ks[8], (nb, H, H)),
        "bb1": jnp.zeros((nb, 1, H), jnp.float32),
        "wb2": glorot(ks[9], (nb, H, H)),
        "bb2": jnp.zeros((nb, 1, H), jnp.float32),
        "w_lin": glorot(ks[10], (H, H)),
        "b_lin": jnp.zeros((1, H), jnp.float32),
        "wa1": glorot(ks[11], (na, H, H)),
        "ba1": jnp.zeros((na, 1, H), jnp.float32),
        "wa2": glorot(ks[12], (na, H, H)),
        "ba2": jnp.zeros((na, 1, H), jnp.float32),
    }


if __name__ == "__main__":
    # Module hyperparameters (small, DimeNet++-like)
    H = 32          # hidden_channels
    I = 16          # int_emb_size
    Bemb = 8        # basis_emb_size
    NS, NR = 4, 8   # num_spherical, num_radial
    nb, na = 1, 2   # num_before_skip, num_after_skip

    key = jax.random.PRNGKey(0)
    kp, kd = jax.random.split(key)
    params = init_params(kp, H, I, Bemb, NS, NR, nb, na)

    def make_inputs(k, E, T):
        kx, kr, ks, k1, k2 = jax.random.split(k, 5)
        x = jax.random.normal(kx, (E, H), dtype=jnp.float32)
        rbf = jax.random.normal(kr, (E, NR), dtype=jnp.float32)
        sbf = jax.random.normal(ks, (T, NS * NR), dtype=jnp.float32)
        idx_kj = jax.random.randint(k1, (T,), 0, E)
        idx_ji = jax.random.randint(k2, (T,), 0, E)
        return x, rbf, sbf, idx_kj, idx_ji

    run = jax.jit(interaction_pp_block,
                  static_argnames=("force_path", "tile_e", "tile_t"))

    def check(inputs, force_path, **tiles):
        out = jax.block_until_ready(run(*inputs, params, force_path=force_path, **tiles))
        ref = reference_forward(*inputs, params)
        assert out.shape == ref.shape
        assert bool(jnp.all(jnp.isfinite(out)))
        # Kernels use bf16 MXU operands (per the perf review) with f32
        # accumulation vs. an f32 XLA reference; 5e-2 comfortably bounds that.
        # Drop the .astype(bfloat16) casts for <=1e-2 agreement if ever needed.
        assert bool(jnp.allclose(out, ref, rtol=5e-2, atol=5e-2)), \
            float(jnp.max(jnp.abs(out - ref)))
        return out

    k1, k2 = jax.random.split(kd)

    # Small problem: auto-selects the fully fused single-kernel path.
    small = make_inputs(k1, 16, 24)
    check(small, None)
    # Same problem through the tiled 3-kernel path (single grid step each).
    check(small, "tiled")
    # Larger problem with non-tile-multiple E/T and small tile overrides:
    # exercises padding, multi-step "parallel" edge grids and the resident
    # x_agg accumulator across several "arbitrary" T steps.
    big = make_inputs(k2, 600, 1400)
    check(big, "tiled", tile_e=256, tile_t=512)

    print("KERNEL_OK")
</pallas_src>

<mosaic_0001>
module attributes {stable_mosaic.version = 11 : i64} {
  func.func @fused_kernel(%arg0: i32, %arg1: memref<16x32xf32, #tpu.memory_space<vmem>>, %arg2: memref<16x8xf32, #tpu.memory_space<vmem>>, %arg3: memref<24x32xf32, #tpu.memory_space<vmem>>, %arg4: memref<24x1xi32, #tpu.memory_space<vmem>>, %arg5: memref<1x24xi32, #tpu.memory_space<vmem>>, %arg6: memref<32x64xbf16, #tpu.memory_space<vmem>>, %arg7: memref<1x64xf32, #tpu.memory_space<vmem>>, %arg8: memref<8x32xbf16, #tpu.memory_space<vmem>>, %arg9: memref<32x16xbf16, #tpu.memory_space<vmem>>, %arg10: memref<32x16xbf16, #tpu.memory_space<vmem>>, %arg11: memref<16x32xbf16, #tpu.memory_space<vmem>>, %arg12: memref<6x32x32xbf16, #tpu.memory_space<vmem>>, %arg13: memref<6x1x32xf32, #tpu.memory_space<vmem>>, %arg14: memref<32x32xbf16, #tpu.memory_space<vmem>>, %arg15: memref<1x32xf32, #tpu.memory_space<vmem>>, %arg16: memref<16x32xf32, #tpu.memory_space<vmem>>) attributes {dimension_semantics = [#tpu.dimension_semantics<arbitrary>], iteration_bounds = array<i64: 1>, scalar_prefetch = 0 : i64, scratch_operands = 0 : i64, tpu.core_type = #tpu.core_type<tc>, window_params = [{pipeline_mode = #tpu.pipeline_mode<synchronous>, transform_indices = @transform_0, window_bounds = array<i64: 16, 32>}, {pipeline_mode = #tpu.pipeline_mode<synchronous>, transform_indices = @transform_1, window_bounds = array<i64: 16, 8>}, {pipeline_mode = #tpu.pipeline_mode<synchronous>, transform_indices = @transform_2, window_bounds = array<i64: 24, 32>}, {pipeline_mode = #tpu.pipeline_mode<synchronous>, transform_indices = @transform_3, window_bounds = array<i64: 24, 1>}, {pipeline_mode = #tpu.pipeline_mode<synchronous>, transform_indices = @transform_4, window_bounds = array<i64: 1, 24>}, {pipeline_mode = #tpu.pipeline_mode<synchronous>, transform_indices = @transform_5, window_bounds = array<i64: 32, 64>}, {pipeline_mode = #tpu.pipeline_mode<synchronous>, transform_indices = @transform_6, window_bounds = array<i64: 1, 64>}, {pipeline_mode = #tpu.pipeline_mode<synchronous>, transform_indices = @transform_7, window_bounds = array<i64: 8, 32>}, {pipeline_mode = #tpu.pipeline_mode<synchronous>, transform_indices = @transform_8, window_bounds = array<i64: 32, 16>}, {pipeline_mode = #tpu.pipeline_mode<synchronous>, transform_indices = @transform_9, window_bounds = array<i64: 32, 16>}, {pipeline_mode = #tpu.pipeline_mode<synchronous>, transform_indices = @transform_10, window_bounds = array<i64: 16, 32>}, {pipeline_mode = #tpu.pipeline_mode<synchronous>, transform_indices = @transform_11, window_bounds = array<i64: 6, 32, 32>}, {pipeline_mode = #tpu.pipeline_mode<synchronous>, transform_indices = @transform_12, window_bounds = array<i64: 6, 1, 32>}, {pipeline_mode = #tpu.pipeline_mode<synchronous>, transform_indices = @transform_13, window_bounds = array<i64: 32, 32>}, {pipeline_mode = #tpu.pipeline_mode<synchronous>, transform_indices = @transform_14, window_bounds = array<i64: 1, 32>}, {pipeline_mode = #tpu.pipeline_mode<synchronous>, transform_indices = @transform_15, window_bounds = array<i64: 16, 32>}]} {
    %c0 = arith.constant 0 : index
    %c0_0 = arith.constant 0 : index
    %0 = vector.load %arg1[%c0, %c0_0] : memref<16x32xf32, #tpu.memory_space<vmem>>, vector<16x32xf32>
    %1 = arith.truncf %0 : vector<16x32xf32> to vector<16x32xbf16>
    %c0_1 = arith.constant 0 : index
    %c0_2 = arith.constant 0 : index
    %2 = vector.load %arg6[%c0_1, %c0_2] : memref<32x64xbf16, #tpu.memory_space<vmem>>, vector<32x64xbf16>
    %cst = arith.constant dense<0.000000e+00> : vector<16x64xf32>
    %3 = tpu.matmul %1, %2, %cst {dimension_numbers = #tpu.dot_dimension_numbers<[1], [0], [0], [1], [0, 0, 1, 1], [], []>} : vector<16x32xbf16>, vector<32x64xbf16>, vector<16x64xf32> -> vector<16x64xf32>
    %c0_3 = arith.constant 0 : index
    %c0_4 = arith.constant 0 : index
    %4 = vector.load %arg7[%c0_3, %c0_4] : memref<1x64xf32, #tpu.memory_space<vmem>>, vector<1x64xf32>
    %5 = vector.broadcast %4 : vector<1x64xf32> to vector<16x64xf32>
    %6 = arith.addf %3, %5 : vector<16x64xf32>
    %cst_5 = arith.constant 0.000000e+00 : f32
    %7 = vector.broadcast %cst_5 : f32 to vector<16x64xf32>
    %8 = arith.subf %7, %6 : vector<16x64xf32>
    %9 = math.exp %8 : vector<16x64xf32>
    %cst_6 = arith.constant 1.000000e+00 : f32
    %10 = vector.broadcast %cst_6 : f32 to vector<16x64xf32>
    %11 = arith.addf %10, %9 : vector<16x64xf32>
    %12 = tpu.reciprocal %11 {approx = true} : vector<16x64xf32> -> vector<16x64xf32>
    %13 = arith.mulf %6, %12 : vector<16x64xf32>
    %14 = vector.extract_strided_slice %13 {offsets = [0, 0], sizes = [16, 32], strides = [1, 1]} : vector<16x64xf32> to vector<16x32xf32>
    %c0_7 = arith.constant 0 : index
    %c0_8 = arith.constant 0 : index
    %15 = vector.load %arg2[%c0_7, %c0_8] : memref<16x8xf32, #tpu.memory_space<vmem>>, vector<16x8xf32>
    %16 = arith.truncf %15 : vector<16x8xf32> to vector<16x8xbf16>
    %c0_9 = arith.constant 0 : index
    %c0_10 = arith.constant 0 : index
    %17 = vector.load %arg8[%c0_9, %c0_10] : memref<8x32xbf16, #tpu.memory_space<vmem>>, vector<8x32xbf16>
    %cst_11 = arith.constant dense<0.000000e+00> : vector<16x32xf32>
    %18 = tpu.matmul %16, %17, %cst_11 {dimension_numbers = #tpu.dot_dimension_numbers<[1], [0], [0], [1], [0, 0, 1, 1], [], []>} : vector<16x8xbf16>, vector<8x32xbf16>, vector<16x32xf32> -> vector<16x32xf32>
    %19 = vector.extract_strided_slice %13 {offsets = [0, 32], sizes = [16, 32], strides = [1, 1]} : vector<16x64xf32> to vector<16x32xf32>
    %20 = arith.mulf %19, %18 : vector<16x32xf32>
    %21 = arith.truncf %20 : vector<16x32xf32> to vector<16x32xbf16>
    %c0_12 = arith.constant 0 : index
    %c0_13 = arith.constant 0 : index
    %22 = vector.load %arg9[%c0_12, %c0_13] : memref<32x16xbf16, #tpu.memory_space<vmem>>, vector<32x16xbf16>
    %cst_14 = arith.constant dense<0.000000e+00> : vector<16x16xf32>
    %23 = tpu.matmul %21, %22, %cst_14 {dimension_numbers = #tpu.dot_dimension_numbers<[1], [0], [0], [1], [0, 0, 1, 1], [], []>} : vector<16x32xbf16>, vector<32x16xbf16>, vector<16x16xf32> -> vector<16x16xf32>
    %cst_15 = arith.constant 0.000000e+00 : f32
    %24 = vector.broadcast %cst_15 : f32 to vector<16x16xf32>
    %25 = arith.subf %24, %23 : vector<16x16xf32>
    %26 = math.exp %25 : vector<16x16xf32>
    %cst_16 = arith.constant 1.000000e+00 : f32
    %27 = vector.broadcast %cst_16 : f32 to vector<16x16xf32>
    %28 = arith.addf %27, %26 : vector<16x16xf32>
    %29 = tpu.reciprocal %28 {approx = true} : vector<16x16xf32> -> vector<16x16xf32>
    %30 = arith.mulf %23, %29 : vector<16x16xf32>
    %31 = tpu.iota {dimensions = array<i32: 1>} : vector<24x16xi32>
    %c0_17 = arith.constant 0 : index
    %c0_18 = arith.constant 0 : index
    %32 = vector.load %arg4[%c0_17, %c0_18] : memref<24x1xi32, #tpu.memory_space<vmem>>, vector<24x1xi32>
    %33 = vector.broadcast %32 : vector<24x1xi32> to vector<24x16xi32>
    %34 = arith.cmpi eq, %31, %33 : vector<24x16xi32>
    %35 = arith.extui %34 : vector<24x16xi1> to vector<24x16xi32>
    %36 = arith.sitofp %35 : vector<24x16xi32> to vector<24x16xf32>
    %37 = arith.truncf %36 : vector<24x16xf32> to vector<24x16xbf16>
    %38 = arith.truncf %30 : vector<16x16xf32> to vector<16x16xbf16>
    %cst_19 = arith.constant dense<0.000000e+00> : vector<24x16xf32>
    %39 = tpu.matmul %37, %38, %cst_19 {dimension_numbers = #tpu.dot_dimension_numbers<[1], [0], [0], [1], [0, 0, 1, 1], [], []>} : vector<24x16xbf16>, vector<16x16xbf16>, vector<24x16xf32> -> vector<24x16xf32>
    %c0_20 = arith.constant 0 : index
    %c0_21 = arith.constant 0 : index
    %40 = vector.load %arg3[%c0_20, %c0_21] : memref<24x32xf32, #tpu.memory_space<vmem>>, vector<24x32xf32>
    %41 = arith.truncf %40 : vector<24x32xf32> to vector<24x32xbf16>
    %c0_22 = arith.constant 0 : index
    %c0_23 = arith.constant 0 : index
    %42 = vector.load %arg10[%c0_22, %c0_23] : memref<32x16xbf16, #tpu.memory_space<vmem>>, vector<32x16xbf16>
    %cst_24 = arith.constant dense<0.000000e+00> : vector<24x16xf32>
    %43 = tpu.matmul %41, %42, %cst_24 {dimension_numbers = #tpu.dot_dimension_numbers<[1], [0], [0], [1], [0, 0, 1, 1], [], []>} : vector<24x32xbf16>, vector<32x16xbf16>, vector<24x16xf32> -> vector<24x16xf32>
    %44 = arith.mulf %39, %43 : vector<24x16xf32>
    %45 = arith.truncf %44 : vector<24x16xf32> to vector<24x16xbf16>
    %46 = tpu.iota {dimensions = array<i32: 0>} : vector<16x24xi32>
    %c0_25 = arith.constant 0 : index
    %c0_26 = arith.constant 0 : index
    %47 = vector.load %arg5[%c0_25, %c0_26] : memref<1x24xi32, #tpu.memory_space<vmem>>, vector<1x24xi32>
    %48 = vector.broadcast %47 : vector<1x24xi32> to vector<16x24xi32>
    %49 = arith.cmpi eq, %46, %48 : vector<16x24xi32>
    %50 = arith.extui %49 : vector<16x24xi1> to vector<16x24xi32>
    %51 = arith.sitofp %50 : vector<16x24xi32> to vector<16x24xf32>
    %52 = arith.truncf %51 : vector<16x24xf32> to vector<16x24xbf16>
    %cst_27 = arith.constant dense<0.000000e+00> : vector<16x16xf32>
    %53 = tpu.matmul %52, %45, %cst_27 {dimension_numbers = #tpu.dot_dimension_numbers<[1], [0], [0], [1], [0, 0, 1, 1], [], []>} : vector<16x24xbf16>, vector<24x16xbf16>, vector<16x16xf32> -> vector<16x16xf32>
    %54 = arith.truncf %53 : vector<16x16xf32> to vector<16x16xbf16>
    %c0_28 = arith.constant 0 : index
    %c0_29 = arith.constant 0 : index
    %55 = vector.load %arg11[%c0_28, %c0_29] : memref<16x32xbf16, #tpu.memory_space<vmem>>, vector<16x32xbf16>
    %cst_30 = arith.constant dense<0.000000e+00> : vector<16x32xf32>
    %56 = tpu.matmul %54, %55, %cst_30 {dimension_numbers = #tpu.dot_dimension_numbers<[1], [0], [0], [1], [0, 0, 1, 1], [], []>} : vector<16x16xbf16>, vector<16x32xbf16>, vector<16x32xf32> -> vector<16x32xf32>
    %cst_31 = arith.constant 0.000000e+00 : f32
    %57 = vector.broadcast %cst_31 : f32 to vector<16x32xf32>
    %58 = arith.subf %57, %56 : vector<16x32xf32>
    %59 = math.exp %58 : vector<16x32xf32>
    %cst_32 = arith.constant 1.000000e+00 : f32
    %60 = vector.broadcast %cst_32 : f32 to vector<16x32xf32>
    %61 = arith.addf %60, %59 : vector<16x32xf32>
    %62 = tpu.reciprocal %61 {approx = true} : vector<16x32xf32> -> vector<16x32xf32>
    %63 = arith.mulf %56, %62 : vector<16x32xf32>
    %64 = arith.addf %14, %63 : vector<16x32xf32>
    %65 = arith.truncf %64 : vector<16x32xf32> to vector<16x32xbf16>
    %c0_33 = arith.constant 0 : index
    %c0_34 = arith.constant 0 : index
    %c0_35 = arith.constant 0 : index
    %66 = vector.load %arg12[%c0_33, %c0_34, %c0_35] : memref<6x32x32xbf16, #tpu.memory_space<vmem>>, vector<1x32x32xbf16>
    %67 = vector.shape_cast %66 : vector<1x32x32xbf16> to vector<32x32xbf16>
    %cst_36 = arith.constant dense<0.000000e+00> : vector<16x32xf32>
    %68 = tpu.matmul %65, %67, %cst_36 {dimension_numbers = #tpu.dot_dimension_numbers<[1], [0], [0], [1], [0, 0, 1, 1], [], []>} : vector<16x32xbf16>, vector<32x32xbf16>, vector<16x32xf32> -> vector<16x32xf32>
    %c0_37 = arith.constant 0 : index
    %c0_38 = arith.constant 0 : index
    %c0_39 = arith.constant 0 : index
    %69 = vector.load %arg13[%c0_37, %c0_38, %c0_39] : memref<6x1x32xf32, #tpu.memory_space<vmem>>, vector<1x1x32xf32>
    %70 = vector.shape_cast %69 : vector<1x1x32xf32> to vector<1x32xf32>
    %71 = vector.broadcast %70 : vector<1x32xf32> to vector<16x32xf32>
    %72 = arith.addf %68, %71 : vector<16x32xf32>
    %cst_40 = arith.constant 0.000000e+00 : f32
    %73 = vector.broadcast %cst_40 : f32 to vector<16x32xf32>
    %74 = arith.subf %73, %72 : vector<16x32xf32>
    %75 = math.exp %74 : vector<16x32xf32>
    %cst_41 = arith.constant 1.000000e+00 : f32
    %76 = vector.broadcast %cst_41 : f32 to vector<16x32xf32>
    %77 = arith.addf %76, %75 : vector<16x32xf32>
    %78 = tpu.reciprocal %77 {approx = true} : vector<16x32xf32> -> vector<16x32xf32>
    %79 = arith.mulf %72, %78 : vector<16x32xf32>
    %80 = arith.truncf %79 : vector<16x32xf32> to vector<16x32xbf16>
    %c1 = arith.constant 1 : index
    %c0_42 = arith.constant 0 : index
    %c0_43 = arith.constant 0 : index
    %81 = vector.load %arg12[%c1, %c0_42, %c0_43] : memref<6x32x32xbf16, #tpu.memory_space<vmem>>, vector<1x32x32xbf16>
    %82 = vector.shape_cast %81 : vector<1x32x32xbf16> to vector<32x32xbf16>
    %cst_44 = arith.constant dense<0.000000e+00> : vector<16x32xf32>
    %83 = tpu.matmul %80, %82, %cst_44 {dimension_numbers = #tpu.dot_dimension_numbers<[1], [0], [0], [1], [0, 0, 1, 1], [], []>} : vector<16x32xbf16>, vector<32x32xbf16>, vector<16x32xf32> -> vector<16x32xf32>
    %c1_45 = arith.constant 1 : index
    %c0_46 = arith.constant 0 : index
    %c0_47 = arith.constant 0 : index
    %84 = vector.load %arg13[%c1_45, %c0_46, %c0_47] : memref<6x1x32xf32, #tpu.memory_space<vmem>>, vector<1x1x32xf32>
    %85 = vector.shape_cast %84 : vector<1x1x32xf32> to vector<1x32xf32>
    %86 = vector.broadcast %85 : vector<1x32xf32> to vector<16x32xf32>
    %87 = arith.addf %83, %86 : vector<16x32xf32>
    %cst_48 = arith.constant 0.000000e+00 : f32
    %88 = vector.broadcast %cst_48 : f32 to vector<16x32xf32>
    %89 = arith.subf %88, %87 : vector<16x32xf32>
    %90 = math.exp %89 : vector<16x32xf32>
    %cst_49 = arith.constant 1.000000e+00 : f32
    %91 = vector.broadcast %cst_49 : f32 to vector<16x32xf32>
    %92 = arith.addf %91, %90 : vector<16x32xf32>
    %93 = tpu.reciprocal %92 {approx = true} : vector<16x32xf32> -> vector<16x32xf32>
    %94 = arith.mulf %87, %93 : vector<16x32xf32>
    %95 = arith.addf %64, %94 : vector<16x32xf32>
    %96 = arith.truncf %95 : vector<16x32xf32> to vector<16x32xbf16>
    %c0_50 = arith.constant 0 : index
    %c0_51 = arith.constant 0 : index
    %97 = vector.load %arg14[%c0_50, %c0_51] : memref<32x32xbf16, #tpu.memory_space<vmem>>, vector<32x32xbf16>
    %cst_52 = arith.constant dense<0.000000e+00> : vector<16x32xf32>
    %98 = tpu.matmul %96, %97, %cst_52 {dimension_numbers = #tpu.dot_dimension_numbers<[1], [0], [0], [1], [0, 0, 1, 1], [], []>} : vector<16x32xbf16>, vector<32x32xbf16>, vector<16x32xf32> -> vector<16x32xf32>
    %c0_53 = arith.constant 0 : index
    %c0_54 = arith.constant 0 : index
    %99 = vector.load %arg15[%c0_53, %c0_54] : memref<1x32xf32, #tpu.memory_space<vmem>>, vector<1x32xf32>
    %100 = vector.broadcast %99 : vector<1x32xf32> to vector<16x32xf32>
    %101 = arith.addf %98, %100 : vector<16x32xf32>
    %cst_55 = arith.constant 0.000000e+00 : f32
    %102 = vector.broadcast %cst_55 : f32 to vector<16x32xf32>
    %103 = arith.subf %102, %101 : vector<16x32xf32>
    %104 = math.exp %103 : vector<16x32xf32>
    %cst_56 = arith.constant 1.000000e+00 : f32
    %105 = vector.broadcast %cst_56 : f32 to vector<16x32xf32>
    %106 = arith.addf %105, %104 : vector<16x32xf32>
    %107 = tpu.reciprocal %106 {approx = true} : vector<16x32xf32> -> vector<16x32xf32>
    %108 = arith.mulf %101, %107 : vector<16x32xf32>
    %109 = arith.addf %108, %0 : vector<16x32xf32>
    %110 = arith.truncf %109 : vector<16x32xf32> to vector<16x32xbf16>
    %c2 = arith.constant 2 : index
    %c0_57 = arith.constant 0 : index
    %c0_58 = arith.constant 0 : index
    %111 = vector.load %arg12[%c2, %c0_57, %c0_58] : memref<6x32x32xbf16, #tpu.memory_space<vmem>>, vector<1x32x32xbf16>
    %112 = vector.shape_cast %111 : vector<1x32x32xbf16> to vector<32x32xbf16>
    %cst_59 = arith.constant dense<0.000000e+00> : vector<16x32xf32>
    %113 = tpu.matmul %110, %112, %cst_59 {dimension_numbers = #tpu.dot_dimension_numbers<[1], [0], [0], [1], [0, 0, 1, 1], [], []>} : vector<16x32xbf16>, vector<32x32xbf16>, vector<16x32xf32> -> vector<16x32xf32>
    %c2_60 = arith.constant 2 : index
    %c0_61 = arith.constant 0 : index
    %c0_62 = arith.constant 0 : index
    %114 = vector.load %arg13[%c2_60, %c0_61, %c0_62] : memref<6x1x32xf32, #tpu.memory_space<vmem>>, vector<1x1x32xf32>
    %115 = vector.shape_cast %114 : vector<1x1x32xf32> to vector<1x32xf32>
    %116 = vector.broadcast %115 : vector<1x32xf32> to vector<16x32xf32>
    %117 = arith.addf %113, %116 : vector<16x32xf32>
    %cst_63 = arith.constant 0.000000e+00 : f32
    %118 = vector.broadcast %cst_63 : f32 to vector<16x32xf32>
    %119 = arith.subf %118, %117 : vector<16x32xf32>
    %120 = math.exp %119 : vector<16x32xf32>
    %cst_64 = arith.constant 1.000000e+00 : f32
    %121 = vector.broadcast %cst_64 : f32 to vector<16x32xf32>
    %122 = arith.addf %121, %120 : vector<16x32xf32>
    %123 = tpu.reciprocal %122 {approx = true} : vector<16x32xf32> -> vector<16x32xf32>
    %124 = arith.mulf %117, %123 : vector<16x32xf32>
    %125 = arith.truncf %124 : vector<16x32xf32> to vector<16x32xbf16>
    %c3 = arith.constant 3 : index
    %c0_65 = arith.constant 0 : index
    %c0_66 = arith.constant 0 : index
    %126 = vector.load %arg12[%c3, %c0_65, %c0_66] : memref<6x32x32xbf16, #tpu.memory_space<vmem>>, vector<1x32x32xbf16>
    %127 = vector.shape_cast %126 : vector<1x32x32xbf16> to vector<32x32xbf16>
    %cst_67 = arith.constant dense<0.000000e+00> : vector<16x32xf32>
    %128 = tpu.matmul %125, %127, %cst_67 {dimension_numbers = #tpu.dot_dimension_numbers<[1], [0], [0], [1], [0, 0, 1, 1], [], []>} : vector<16x32xbf16>, vector<32x32xbf16>, vector<16x32xf32> -> vector<16x32xf32>
    %c3_68 = arith.constant 3 : index
    %c0_69 = arith.constant 0 : index
    %c0_70 = arith.constant 0 : index
    %129 = vector.load %arg13[%c3_68, %c0_69, %c0_70] : memref<6x1x32xf32, #tpu.memory_space<vmem>>, vector<1x1x32xf32>
    %130 = vector.shape_cast %129 : vector<1x1x32xf32> to vector<1x32xf32>
    %131 = vector.broadcast %130 : vector<1x32xf32> to vector<16x32xf32>
    %132 = arith.addf %128, %131 : vector<16x32xf32>
    %cst_71 = arith.constant 0.000000e+00 : f32
    %133 = vector.broadcast %cst_71 : f32 to vector<16x32xf32>
    %134 = arith.subf %133, %132 : vector<16x32xf32>
    %135 = math.exp %134 : vector<16x32xf32>
    %cst_72 = arith.constant 1.000000e+00 : f32
    %136 = vector.broadcast %cst_72 : f32 to vector<16x32xf32>
    %137 = arith.addf %136, %135 : vector<16x32xf32>
    %138 = tpu.reciprocal %137 {approx = true} : vector<16x32xf32> -> vector<16x32xf32>
    %139 = arith.mulf %132, %138 : vector<16x32xf32>
    %140 = arith.addf %109, %139 : vector<16x32xf32>
    %141 = arith.truncf %140 : vector<16x32xf32> to vector<16x32xbf16>
    %c4 = arith.constant 4 : index
    %c0_73 = arith.constant 0 : index
    %c0_74 = arith.constant 0 : index
    %142 = vector.load %arg12[%c4, %c0_73, %c0_74] : memref<6x32x32xbf16, #tpu.memory_space<vmem>>, vector<1x32x32xbf16>
    %143 = vector.shape_cast %142 : vector<1x32x32xbf16> to vector<32x32xbf16>
    %cst_75 = arith.constant dense<0.000000e+00> : vector<16x32xf32>
    %144 = tpu.matmul %141, %143, %cst_75 {dimension_numbers = #tpu.dot_dimension_numbers<[1], [0], [0], [1], [0, 0, 1, 1], [], []>} : vector<16x32xbf16>, vector<32x32xbf16>, vector<16x32xf32> -> vector<16x32xf32>
    %c4_76 = arith.constant 4 : index
    %c0_77 = arith.constant 0 : index
    %c0_78 = arith.constant 0 : index
    %145 = vector.load %arg13[%c4_76, %c0_77, %c0_78] : memref<6x1x32xf32, #tpu.memory_space<vmem>>, vector<1x1x32xf32>
    %146 = vector.shape_cast %145 : vector<1x1x32xf32> to vector<1x32xf32>
    %147 = vector.broadcast %146 : vector<1x32xf32> to vector<16x32xf32>
    %148 = arith.addf %144, %147 : vector<16x32xf32>
    %cst_79 = arith.constant 0.000000e+00 : f32
    %149 = vector.broadcast %cst_79 : f32 to vector<16x32xf32>
    %150 = arith.subf %149, %148 : vector<16x32xf32>
    %151 = math.exp %150 : vector<16x32xf32>
    %cst_80 = arith.constant 1.000000e+00 : f32
    %152 = vector.broadcast %cst_80 : f32 to vector<16x32xf32>
    %153 = arith.addf %152, %151 : vector<16x32xf32>
    %154 = tpu.reciprocal %153 {approx = true} : vector<16x32xf32> -> vector<16x32xf32>
    %155 = arith.mulf %148, %154 : vector<16x32xf32>
    %156 = arith.truncf %155 : vector<16x32xf32> to vector<16x32xbf16>
    %c5 = arith.constant 5 : index
    %c0_81 = arith.constant 0 : index
    %c0_82 = arith.constant 0 : index
    %157 = vector.load %arg12[%c5, %c0_81, %c0_82] : memref<6x32x32xbf16, #tpu.memory_space<vmem>>, vector<1x32x32xbf16>
    %158 = vector.shape_cast %157 : vector<1x32x32xbf16> to vector<32x32xbf16>
    %cst_83 = arith.constant dense<0.000000e+00> : vector<16x32xf32>
    %159 = tpu.matmul %156, %158, %cst_83 {dimension_numbers = #tpu.dot_dimension_numbers<[1], [0], [0], [1], [0, 0, 1, 1], [], []>} : vector<16x32xbf16>, vector<32x32xbf16>, vector<16x32xf32> -> vector<16x32xf32>
    %c5_84 = arith.constant 5 : index
    %c0_85 = arith.constant 0 : index
    %c0_86 = arith.constant 0 : index
    %160 = vector.load %arg13[%c5_84, %c0_85, %c0_86] : memref<6x1x32xf32, #tpu.memory_space<vmem>>, vector<1x1x32xf32>
    %161 = vector.shape_cast %160 : vector<1x1x32xf32> to vector<1x32xf32>
    %162 = vector.broadcast %161 : vector<1x32xf32> to vector<16x32xf32>
    %163 = arith.addf %159, %162 : vector<16x32xf32>
    %cst_87 = arith.constant 0.000000e+00 : f32
    %164 = vector.broadcast %cst_87 : f32 to vector<16x32xf32>
    %165 = arith.subf %164, %163 : vector<16x32xf32>
    %166 = math.exp %165 : vector<16x32xf32>
    %cst_88 = arith.constant 1.000000e+00 : f32
    %167 = vector.broadcast %cst_88 : f32 to vector<16x32xf32>
    %168 = arith.addf %167, %166 : vector<16x32xf32>
    %169 = tpu.reciprocal %168 {approx = true} : vector<16x32xf32> -> vector<16x32xf32>
    %170 = arith.mulf %163, %169 : vector<16x32xf32>
    %171 = arith.addf %140, %170 : vector<16x32xf32>
    %c0_89 = arith.constant 0 : index
    %c0_90 = arith.constant 0 : index
    %172 = vector.load %arg16[%c0_89, %c0_90] : memref<16x32xf32, #tpu.memory_space<vmem>>, vector<16x32xf32>
    tpu.vector_store %arg16[%c0_89, %c0_90], %171 {strides = array<i32>} : memref<16x32xf32, #tpu.memory_space<vmem>>, vector<16x32xf32>,
    return
  }
  func.func @transform_0(%arg0: i32) -> (i32, i32) {
    %c0_i32 = arith.constant 0 : i32
    %c0_i32_0 = arith.constant 0 : i32
    %c0_i32_1 = arith.constant 0 : i32
    return %c0_i32, %c0_i32_0 : i32, i32
  }
  func.func @transform_1(%arg0: i32) -> (i32, i32) {
    %c0_i32 = arith.constant 0 : i32
    %c0_i32_0 = arith.constant 0 : i32
    %c0_i32_1 = arith.constant 0 : i32
    return %c0_i32, %c0_i32_0 : i32, i32
  }
  func.func @transform_2(%arg0: i32) -> (i32, i32) {
    %c0_i32 = arith.constant 0 : i32
    %c0_i32_0 = arith.constant 0 : i32
    %c0_i32_1 = arith.constant 0 : i32
    return %c0_i32, %c0_i32_0 : i32, i32
  }
  func.func @transform_3(%arg0: i32) -> (i32, i32) {
    %c0_i32 = arith.constant 0 : i32
    %c0_i32_0 = arith.constant 0 : i32
    %c0_i32_1 = arith.constant 0 : i32
    return %c0_i32, %c0_i32_0 : i32, i32
  }
  func.func @transform_4(%arg0: i32) -> (i32, i32) {
    %c0_i32 = arith.constant 0 : i32
    %c0_i32_0 = arith.constant 0 : i32
    %c0_i32_1 = arith.constant 0 : i32
    return %c0_i32, %c0_i32_0 : i32, i32
  }
  func.func @transform_5(%arg0: i32) -> (i32, i32) {
    %c0_i32 = arith.constant 0 : i32
    %c0_i32_0 = arith.constant 0 : i32
    %c0_i32_1 = arith.constant 0 : i32
    return %c0_i32, %c0_i32_0 : i32, i32
  }
  func.func @transform_6(%arg0: i32) -> (i32, i32) {
    %c0_i32 = arith.constant 0 : i32
    %c0_i32_0 = arith.constant 0 : i32
    %c0_i32_1 = arith.constant 0 : i32
    return %c0_i32, %c0_i32_0 : i32, i32
  }
  func.func @transform_7(%arg0: i32) -> (i32, i32) {
    %c0_i32 = arith.constant 0 : i32
    %c0_i32_0 = arith.constant 0 : i32
    %c0_i32_1 = arith.constant 0 : i32
    return %c0_i32, %c0_i32_0 : i32, i32
  }
  func.func @transform_8(%arg0: i32) -> (i32, i32) {
    %c0_i32 = arith.constant 0 : i32
    %c0_i32_0 = arith.constant 0 : i32
    %c0_i32_1 = arith.constant 0 : i32
    return %c0_i32, %c0_i32_0 : i32, i32
  }
  func.func @transform_9(%arg0: i32) -> (i32, i32) {
    %c0_i32 = arith.constant 0 : i32
    %c0_i32_0 = arith.constant 0 : i32
    %c0_i32_1 = arith.constant 0 : i32
    return %c0_i32, %c0_i32_0 : i32, i32
  }
  func.func @transform_10(%arg0: i32) -> (i32, i32) {
    %c0_i32 = arith.constant 0 : i32
    %c0_i32_0 = arith.constant 0 : i32
    %c0_i32_1 = arith.constant 0 : i32
    return %c0_i32, %c0_i32_0 : i32, i32
  }
  func.func @transform_11(%arg0: i32) -> (i32, i32, i32) {
    %c0_i32 = arith.constant 0 : i32
    %c0_i32_0 = arith.constant 0 : i32
    %c0_i32_1 = arith.constant 0 : i32
    %c0_i32_2 = arith.constant 0 : i32
    return %c0_i32, %c0_i32_0, %c0_i32_1 : i32, i32, i32
  }
  func.func @transform_12(%arg0: i32) -> (i32, i32, i32) {
    %c0_i32 = arith.constant 0 : i32
    %c0_i32_0 = arith.constant 0 : i32
    %c0_i32_1 = arith.constant 0 : i32
    %c0_i32_2 = arith.constant 0 : i32
    return %c0_i32, %c0_i32_0, %c0_i32_1 : i32, i32, i32
  }
  func.func @transform_13(%arg0: i32) -> (i32, i32) {
    %c0_i32 = arith.constant 0 : i32
    %c0_i32_0 = arith.constant 0 : i32
    %c0_i32_1 = arith.constant 0 : i32
    return %c0_i32, %c0_i32_0 : i32, i32
  }
  func.func @transform_14(%arg0: i32) -> (i32, i32) {
    %c0_i32 = arith.constant 0 : i32
    %c0_i32_0 = arith.constant 0 : i32
    %c0_i32_1 = arith.constant 0 : i32
    return %c0_i32, %c0_i32_0 : i32, i32
  }
  func.func @transform_15(%arg0: i32) -> (i32, i32) {
    %c0_i32 = arith.constant 0 : i32
    %c0_i32_0 = arith.constant 0 : i32
    %c0_i32_1 = arith.constant 0 : i32
    return %c0_i32, %c0_i32_0 : i32, i32
  }
}

</mosaic_0001>

<llo_original>
// kernel: interaction_pp_block.1
$region0: #{interaction_pp_block.1}
  #allocation0 [shape = 'u32[]', space=smem, size = 0x4, offset = 0x4, fixed_abs, tag = 'smem constant byte address 0x4 - core index']
  #allocation1 [shape = 'u32[144,128]{1,0:T(1,128)}', space=vmem, size = 0x12000, scoped, tag = 'internal scratch']
  %s0 = inlined_call_operand.vmem [shape: f32[16,32], index: 0, kind: input, shape index: {}]
  %s1 = inlined_call_operand.vmem [shape: f32[16,8], index: 1, kind: input, shape index: {}]
  %s2 = inlined_call_operand.vmem [shape: f32[24,32], index: 2, kind: input, shape index: {}]
  %s3 = inlined_call_operand.vmem [shape: s32[24,1], index: 3, kind: input, shape index: {}]
  %s4 = inlined_call_operand.vmem [shape: s32[1,24], index: 4, kind: input, shape index: {}]
  %s5 = inlined_call_operand.vmem [shape: bf16[32,64], index: 5, kind: input, shape index: {}]
  %s6 = inlined_call_operand.vmem [shape: f32[1,64], index: 6, kind: input, shape index: {}]
  %s7 = inlined_call_operand.vmem [shape: bf16[8,32], index: 7, kind: input, shape index: {}]
  %s8 = inlined_call_operand.vmem [shape: bf16[32,16], index: 8, kind: input, shape index: {}]
  %s9 = inlined_call_operand.vmem [shape: bf16[32,16], index: 9, kind: input, shape index: {}]
  %s10 = inlined_call_operand.vmem [shape: bf16[16,32], index: 10, kind: input, shape index: {}]
  %s11 = inlined_call_operand.vmem [shape: bf16[6,32,32], index: 11, kind: input, shape index: {}]
  %s12 = inlined_call_operand.vmem [shape: f32[6,1,32], index: 12, kind: input, shape index: {}]
  %s13 = inlined_call_operand.vmem [shape: bf16[32,32], index: 13, kind: input, shape index: {}]
  %s14 = inlined_call_operand.vmem [shape: f32[1,32], index: 14, kind: input, shape index: {}]
  %s15 = inlined_call_operand.hbm [shape: f32[16,32], index: 15, kind: output, shape index: {}]
  %s16 = sld [smem:[#allocation0]]
  $region70: #{interaction_pp_block.1} parent=0
    _
  %s18 = ssub.s32 1, %s16
  %s19 = scalar_select 0, %s18, %s16
  $region1: #{interaction_pp_block.1} parent=0
    #allocation2 [shape = 'u8[8192]{0}', space=vmem, size = 0x2000, scoped, tag = 'output window, operand 0, single buffered']
    #allocation3 [shape = 's32[1]{0}', space=sflag, size = 0x4, scoped, tag = 'scoped memory for interaction_pp_block.1']
    %20 = vsyncpa [#allocation3], 0
    // Predicated region
    $region2: #{interaction_pp_block.1} parent=1 // pred_check
      _
    $region3: #{interaction_pp_block.1} parent=1 // pred_check_branch
      %22 = sbr.rel (0) target = $region5
    $region4: #{interaction_pp_block.1} parent=1 // pred_region
      _
    $region5: #{interaction_pp_block.1} parent=1 // pred_fallthru
      _
    // Predicated region
    $region6: #{interaction_pp_block.1} parent=1 // pred_check
      _
    $region7: #{interaction_pp_block.1} parent=1 // pred_check_branch
      %24 = sbr.rel (0) target = $region9
    $region8: #{interaction_pp_block.1} parent=1 // pred_region
      _
    $region9: #{interaction_pp_block.1} parent=1 // pred_fallthru
      _
    // Predicated region
    $region10: #{interaction_pp_block.1} parent=1 // pred_check
      _
    $region11: #{interaction_pp_block.1} parent=1 // pred_check_branch
      %26 = sbr.rel (0) target = $region13
    $region12: #{interaction_pp_block.1} parent=1 // pred_region
      _
    $region13: #{interaction_pp_block.1} parent=1 // pred_fallthru
      _
    // Predicated region
    $region14: #{interaction_pp_block.1} parent=1 // pred_check
      _
    $region15: #{interaction_pp_block.1} parent=1 // pred_check_branch
      %28 = sbr.rel (0) target = $region17
    $region16: #{interaction_pp_block.1} parent=1 // pred_region
      _
    $region17: #{interaction_pp_block.1} parent=1 // pred_fallthru
      _
    // Predicated region
    $region18: #{interaction_pp_block.1} parent=1 // pred_check
      _
    $region19: #{interaction_pp_block.1} parent=1 // pred_check_branch
      %30 = sbr.rel (0) target = $region21
    $region20: #{interaction_pp_block.1} parent=1 // pred_region
      _
    $region21: #{interaction_pp_block.1} parent=1 // pred_fallthru
      _
    // Predicated region
    $region22: #{interaction_pp_block.1} parent=1 // pred_check
      _
    $region23: #{interaction_pp_block.1} parent=1 // pred_check_branch
      %32 = sbr.rel (0) target = $region25
    $region24: #{interaction_pp_block.1} parent=1 // pred_region
      _
    $region25: #{interaction_pp_block.1} parent=1 // pred_fallthru
      _
    // Predicated region
    $region26: #{interaction_pp_block.1} parent=1 // pred_check
      _
    $region27: #{interaction_pp_block.1} parent=1 // pred_check_branch
      %34 = sbr.rel (0) target = $region29
    $region28: #{interaction_pp_block.1} parent=1 // pred_region
      _
    $region29: #{interaction_pp_block.1} parent=1 // pred_fallthru
      _
    // Predicated region
    $region30: #{interaction_pp_block.1} parent=1 // pred_check
      _
    $region31: #{interaction_pp_block.1} parent=1 // pred_check_branch
      %36 = sbr.rel (0) target = $region33
    $region32: #{interaction_pp_block.1} parent=1 // pred_region
      _
    $region33: #{interaction_pp_block.1} parent=1 // pred_fallthru
      _
    // Predicated region
    $region34: #{interaction_pp_block.1} parent=1 // pred_check
      _
    $region35: #{interaction_pp_block.1} parent=1 // pred_check_branch
      %38 = sbr.rel (0) target = $region37
    $region36: #{interaction_pp_block.1} parent=1 // pred_region
      _
    $region37: #{interaction_pp_block.1} parent=1 // pred_fallthru
      _
    // Predicated region
    $region38: #{interaction_pp_block.1} parent=1 // pred_check
      _
    $region39: #{interaction_pp_block.1} parent=1 // pred_check_branch
      %40 = sbr.rel (0) target = $region41
    $region40: #{interaction_pp_block.1} parent=1 // pred_region
      _
    $region41: #{interaction_pp_block.1} parent=1 // pred_fallthru
      _
    // Predicated region
    $region42: #{interaction_pp_block.1} parent=1 // pred_check
      _
    $region43: #{interaction_pp_block.1} parent=1 // pred_check_branch
      %42 = sbr.rel (0) target = $region45
    $region44: #{interaction_pp_block.1} parent=1 // pred_region
      _
    $region45: #{interaction_pp_block.1} parent=1 // pred_fallthru
      _
    // Predicated region
    $region46: #{interaction_pp_block.1} parent=1 // pred_check
      _
    $region47: #{interaction_pp_block.1} parent=1 // pred_check_branch
      %44 = sbr.rel (0) target = $region49
    $region48: #{interaction_pp_block.1} parent=1 // pred_region
      _
    $region49: #{interaction_pp_block.1} parent=1 // pred_fallthru
      _
    // Predicated region
    $region50: #{interaction_pp_block.1} parent=1 // pred_check
      _
    $region51: #{interaction_pp_block.1} parent=1 // pred_check_branch
      %46 = sbr.rel (0) target = $region53
    $region52: #{interaction_pp_block.1} parent=1 // pred_region
      _
    $region53: #{interaction_pp_block.1} parent=1 // pred_fallthru
      _
    // Predicated region
    $region54: #{interaction_pp_block.1} parent=1 // pred_check
      _
    $region55: #{interaction_pp_block.1} parent=1 // pred_check_branch
      %48 = sbr.rel (0) target = $region57
    $region56: #{interaction_pp_block.1} parent=1 // pred_region
      _
    $region57: #{interaction_pp_block.1} parent=1 // pred_fallthru
      _
    // Predicated region
    $region58: #{interaction_pp_block.1} parent=1 // pred_check
      _
    $region59: #{interaction_pp_block.1} parent=1 // pred_check_branch
      %50 = sbr.rel (0) target = $region61
    $region60: #{interaction_pp_block.1} parent=1 // pred_region
      _
    $region61: #{interaction_pp_block.1} parent=1 // pred_fallthru
      _
    %v52 = vld [vmem:[%s0] sm:$0xff]
    %v53 = vld [vmem:[%s0 + $0x8] sm:$0xff]
    %v54 = vpack.c.bf16 %v53, %v52
    %v55 = vld [vmem:[%s5] sm:$0xf]
    %v56 = vld [vmem:[%s5 + $0x4] sm:$0xf]
    %v57 = vld [vmem:[%s5 + $0x8] sm:$0xf]
    %v58 = vld [vmem:[%s5 + $0xc] sm:$0xf]
    %v59 = vld [vmem:[%s6] sm:$0x1]
    %v61 = vlaneseq
    %v62 = vshrl.u32 %v61, 7
    %v63 = vsub.s32 0, %v62
    %v64 = vrot.slane %v59, %v63
    %v70 = vunpack.c.l.b16 %v55
    %v71 = vunpack.c.l.b16 %v56
    %v72 = vunpack.c.l.b16 %v57
    %v73 = vunpack.c.l.b16 %v58
    %v74 = vpack.c.b16 %v71, %v70
    %v75 = vpack.c.b16 %v73, %v72
    %vm78 = vcmask 261120
    %v80 = vsel %vm78, %v54, 0
    %82 = vmatprep.subr.bf16.mxu0 0
    %83 = vmatpush1.bf16.msra.mxu0 0
    %84 = vmatprep.subr.bf16.mxu0 0
    %85 = vmatpush1.bf16.msra.mxu0 0
    %86 = vmatprep.subr.bf16.mxu0 0
    %87 = vmatpush1.bf16.msra.mxu0 0
    %88 = vmatprep.subr.bf16.mxu0 0
    %89 = vmatpush1.bf16.msra.mxu0 0
    %90 = vmatprep.subr.bf16.mxu0 0
    %91 = vmatpush1.bf16.msra.mxu0 0
    %92 = vmatprep.subr.bf16.mxu0 0
    %93 = vmatpush1.bf16.msra.mxu0 0
    %94 = vmatprep.subr.bf16.mxu0 0
    %95 = vmatpush1.bf16.msra.mxu0 %v75
    %96 = vmatprep.subr.bf16.mxu0 0
    %97 = vmatpush1.bf16.msra.mxu0 %v74
    %98 = vmatprep.subr.bf16.mxu0 0
    %99 = vmatpush2.bf16.msra.mxu0 0
    %100 = vmatprep.subr.bf16.mxu0 0
    %101 = vmatpush2.bf16.msra.mxu0 0
    %102 = vmatprep.subr.bf16.mxu0 0
    %103 = vmatpush2.bf16.msra.mxu0 0
    %104 = vmatprep.subr.bf16.mxu0 0
    %105 = vmatpush2.bf16.msra.mxu0 0
    %106 = vmatprep.subr.bf16.mxu0 0
    %107 = vmatpush2.bf16.msra.mxu0 0
    %108 = vmatprep.subr.bf16.mxu0 0
    %109 = vmatpush2.bf16.msra.mxu0 0
    %110 = vmatprep.subr.bf16.mxu0 0
    %111 = vmatpush2.bf16.msra.mxu0 0
    %112 = vmatprep.subr.bf16.mxu0 0
    %113 = vmatpush2.bf16.msra.mxu0 0
    %114 = vmatprep.mubr.bf16.mxu0 0
    %115 = vmatmul.mubr.bf16.gmra.mxu0 %v80
    %v116 = vpop.f32.mrf.mxu0
    %v117 = vadd.f32 %v64, %v116
    %v118 = vpop.f32.mrf.mxu0
    %v119 = vpop.f32.mrf.mxu0
    %v120 = vadd.f32 %v64, %v119
    %v121 = vpop.f32.mrf.mxu0
    %122 = vdwg.mxu0
    %v123 = vsub.f32 0.0, %v117
    %v124 = vsub.f32 0.0, %v120
    %v125 = vmul.f32 %v123, 1.442695
    %v126 = vpow.pop %v125
    %v127 = vmul.f32 %v124, 1.442695
    %v128 = vpow.pop %v127
    %v129 = vadd.f32 %v126, 1.0
    %v130 = vadd.f32 %v128, 1.0
    %v131 = vrcp.pop %v129
    %v132 = vrcp.pop %v130
    %v133 = vmul.f32 %v117, %v131
    %v134 = vmul.f32 %v120, %v132
    %v135 = vld [vmem:[%s1] sm:$0xff]
    %v136 = vld [vmem:[%s1 + $0x8] sm:$0xff]
    %v137 = vpack.c.bf16 %v136, %v135
    %v138 = vld [vmem:[%s7] sm:$0xf]
    %vm139 = vcmask 64512
    %v141 = vsel %vm139, %v137, 0
    %vm143 = vcmask 1043456
    %v145 = vsel %vm143, %v138, 0
    %147 = vmatprep.subr.bf16.mxu0 0
    %148 = vmatpush1.bf16.msra.mxu0 0
    %149 = vmatprep.subr.bf16.mxu0 0
    %150 = vmatpush1.bf16.msra.mxu0 0
    %151 = vmatprep.subr.bf16.mxu0 0
    %152 = vmatpush1.bf16.msra.mxu0 0
    %153 = vmatprep.subr.bf16.mxu0 0
    %154 = vmatpush1.bf16.msra.mxu0 0
    %155 = vmatprep.subr.bf16.mxu0 0
    %156 = vmatpush1.bf16.msra.mxu0 0
    %157 = vmatprep.subr.bf16.mxu0 0
    %158 = vmatpush1.bf16.msra.mxu0 0
    %159 = vmatprep.subr.bf16.mxu0 0
    %160 = vmatpush1.bf16.msra.mxu0 0
    %161 = vmatprep.subr.bf16.mxu0 0
    %162 = vmatpush1.bf16.msra.mxu0 %v145
    %163 = vmatprep.subr.bf16.mxu0 0
    %164 = vmatpush2.bf16.msra.mxu0 0
    %165 = vmatprep.subr.bf16.mxu0 0
    %166 = vmatpush2.bf16.msra.mxu0 0
    %167 = vmatprep.subr.bf16.mxu0 0
    %168 = vmatpush2.bf16.msra.mxu0 0
    %169 = vmatprep.subr.bf16.mxu0 0
    %170 = vmatpush2.bf16.msra.mxu0 0
    %171 = vmatprep.subr.bf16.mxu0 0
    %172 = vmatpush2.bf16.msra.mxu0 0
    %173 = vmatprep.subr.bf16.mxu0 0
    %174 = vmatpush2.bf16.msra.mxu0 0
    %175 = vmatprep.subr.bf16.mxu0 0
    %176 = vmatpush2.bf16.msra.mxu0 0
    %177 = vmatprep.subr.bf16.mxu0 0
    %178 = vmatpush2.bf16.msra.mxu0 0
    %179 = vmatprep.mubr.bf16.mxu0 0
    %180 = vmatmul.mubr.bf16.gmra.mxu0 %v141
    %v181 = vpop.f32.mrf.mxu0
    %v182 = vadd.f32 0.0, %v181
    %v183 = vpop.f32.mrf.mxu0
    %v184 = vpop.f32.mrf.mxu0
    %v185 = vadd.f32 0.0, %v184
    %v186 = vpop.f32.mrf.mxu0
    %187 = vdwg.mxu0
    %190 = vrot.lane.b32.xlu0 %v182, 32
    %v191 = vpop.permute.xlu0 %190
    %192 = vrot.lane.b32.xlu0 %v185, 32
    %v193 = vpop.permute.xlu0 %192
    %v196 = vmul.f32 %v133, %v191
    %v197 = vmul.f32 %v134, %v193
    %v198 = vpack.c.bf16 %v197, %v196
    %v199 = vld [vmem:[%s8] sm:$0xf]
    %v200 = vld [vmem:[%s8 + $0x4] sm:$0xf]
    %v201 = vld [vmem:[%s8 + $0x8] sm:$0xf]
    %v202 = vld [vmem:[%s8 + $0xc] sm:$0xf]
    %204 = vrot.lane.b32.xlu0 %v198, 96
    %v205 = vpop.permute.xlu0 %204
    %v210 = vunpack.c.l.b16 %v199
    %v211 = vunpack.c.l.b16 %v200
    %v212 = vunpack.c.l.b16 %v201
    %v213 = vunpack.c.l.b16 %v202
    %v214 = vpack.c.b16 %v211, %v210
    %v215 = vpack.c.b16 %v213, %v212
    %v219 = vsel %vm78, %v205, 0
    %221 = vmatprep.subr.bf16.mxu0 0
    %222 = vmatpush1.bf16.msra.mxu0 0
    %223 = vmatprep.subr.bf16.mxu0 0
    %224 = vmatpush1.bf16.msra.mxu0 0
    %225 = vmatprep.subr.bf16.mxu0 0
    %226 = vmatpush1.bf16.msra.mxu0 0
    %227 = vmatprep.subr.bf16.mxu0 0
    %228 = vmatpush1.bf16.msra.mxu0 0
    %229 = vmatprep.subr.bf16.mxu0 0
    %230 = vmatpush1.bf16.msra.mxu0 0
    %231 = vmatprep.subr.bf16.mxu0 0
    %232 = vmatpush1.bf16.msra.mxu0 0
    %233 = vmatprep.subr.bf16.mxu0 0
    %234 = vmatpush1.bf16.msra.mxu0 %v215
    %235 = vmatprep.subr.bf16.mxu0 0
    %236 = vmatpush1.bf16.msra.mxu0 %v214
    %237 = vmatprep.subr.bf16.mxu0 0
    %238 = vmatpush2.bf16.msra.mxu0 0
    %239 = vmatprep.subr.bf16.mxu0 0
    %240 = vmatpush2.bf16.msra.mxu0 0
    %241 = vmatprep.subr.bf16.mxu0 0
    %242 = vmatpush2.bf16.msra.mxu0 0
    %243 = vmatprep.subr.bf16.mxu0 0
    %244 = vmatpush2.bf16.msra.mxu0 0
    %245 = vmatprep.subr.bf16.mxu0 0
    %246 = vmatpush2.bf16.msra.mxu0 0
    %247 = vmatprep.subr.bf16.mxu0 0
    %248 = vmatpush2.bf16.msra.mxu0 0
    %249 = vmatprep.subr.bf16.mxu0 0
    %250 = vmatpush2.bf16.msra.mxu0 0
    %251 = vmatprep.subr.bf16.mxu0 0
    %252 = vmatpush2.bf16.msra.mxu0 0
    %253 = vmatprep.mubr.bf16.mxu0 0
    %254 = vmatmul.mubr.bf16.gmra.mxu0 %v219
    %v255 = vpop.f32.mrf.mxu0
    %v256 = vadd.f32 0.0, %v255
    %v257 = vpop.f32.mrf.mxu0
    %v258 = vpop.f32.mrf.mxu0
    %v259 = vadd.f32 0.0, %v258
    %v260 = vpop.f32.mrf.mxu0
    %261 = vdwg.mxu0
    %v262 = vsub.f32 0.0, %v256
    %v263 = vsub.f32 0.0, %v259
    %v264 = vmul.f32 %v262, 1.442695
    %v265 = vpow.pop %v264
    %v266 = vmul.f32 %v263, 1.442695
    %v267 = vpow.pop %v266
    %v268 = vadd.f32 %v265, 1.0
    %v269 = vadd.f32 %v267, 1.0
    %v270 = vrcp.pop %v268
    %v271 = vrcp.pop %v269
    %v272 = vmul.f32 %v256, %v270
    %v273 = vmul.f32 %v259, %v271
    %v274 = vlaneseq
    %v275 = vand.u32 %v274, 127
    %v276 = vld [vmem:[%s3] sm:$0xff]
    %v277 = vld [vmem:[%s3 + $0x8] sm:$0xff]
    %v278 = vld [vmem:[%s3 + $0x10] sm:$0xff]
    %279 = vset.pattern.permute.xlu0 0
    %280 = vperm.xlu0 %279, %v276
    %v281 = vpop.permute.xlu0 %280
    %282 = vset.pattern.permute.xlu0 0
    %283 = vperm.xlu0 %282, %v277
    %v284 = vpop.permute.xlu0 %283
    %285 = vset.pattern.permute.xlu0 0
    %286 = vperm.xlu0 %285, %v278
    %v287 = vpop.permute.xlu0 %286
    %vm288 = vcmp.eq.s32.totalorder %v275, %v281
    %vm289 = vcmp.eq.s32.totalorder %v275, %v284
    %vm290 = vcmp.eq.s32.totalorder %v275, %v287
    %v291 = vsel %vm288, 1, 0
    %v292 = vsel %vm289, 1, 0
    %v293 = vsel %vm290, 1, 0
    %v294 = vcvt.s32.f32 %v291
    %v295 = vcvt.s32.f32 %v292
    %v296 = vcvt.s32.f32 %v293
    %v297 = vpack.c.bf16 %v295, %v294
    %v298 = vpack.c.bf16 %v296, %v296
    %v299 = vpack.c.bf16 %v273, %v272
    %vm300 = vcmask 130048
    %v302 = vsel %vm300, %v297, 0
    %v305 = vsel %vm300, %v298, 0
    %307 = vmatprep.subr.bf16.mxu0 0
    %308 = vmatpush1.bf16.msra.mxu0 0
    %309 = vmatprep.subr.bf16.mxu0 0
    %310 = vmatpush1.bf16.msra.mxu0 0
    %311 = vmatprep.subr.bf16.mxu0 0
    %312 = vmatpush1.bf16.msra.mxu0 0
    %313 = vmatprep.subr.bf16.mxu0 0
    %314 = vmatpush1.bf16.msra.mxu0 0
    %315 = vmatprep.subr.bf16.mxu0 0
    %316 = vmatpush1.bf16.msra.mxu0 0
    %317 = vmatprep.subr.bf16.mxu0 0
    %318 = vmatpush1.bf16.msra.mxu0 0
    %319 = vmatprep.subr.bf16.mxu0 0
    %320 = vmatpush1.bf16.msra.mxu0 0
    %321 = vmatprep.subr.bf16.mxu0 0
    %322 = vmatpush1.bf16.msra.mxu0 %v299
    %323 = vmatprep.subr.bf16.mxu0 0
    %324 = vmatpush2.bf16.msra.mxu0 0
    %325 = vmatprep.subr.bf16.mxu0 0
    %326 = vmatpush2.bf16.msra.mxu0 0
    %327 = vmatprep.subr.bf16.mxu0 0
    %328 = vmatpush2.bf16.msra.mxu0 0
    %329 = vmatprep.subr.bf16.mxu0 0
    %330 = vmatpush2.bf16.msra.mxu0 0
    %331 = vmatprep.subr.bf16.mxu0 0
    %332 = vmatpush2.bf16.msra.mxu0 0
    %333 = vmatprep.subr.bf16.mxu0 0
    %334 = vmatpush2.bf16.msra.mxu0 0
    %335 = vmatprep.subr.bf16.mxu0 0
    %336 = vmatpush2.bf16.msra.mxu0 0
    %337 = vmatprep.subr.bf16.mxu0 0
    %338 = vmatpush2.bf16.msra.mxu0 0
    %339 = vmatprep.mubr.bf16.mxu0 0
    %340 = vmatmul.mubr.bf16.gmra.mxu0 %v302
    %v341 = vpop.f32.mrf.mxu0
    %v342 = vadd.f32 0.0, %v341
    %v343 = vpop.f32.mrf.mxu0
    %v344 = vpop.f32.mrf.mxu0
    %v345 = vadd.f32 0.0, %v344
    %v346 = vpop.f32.mrf.mxu0
    %347 = vmatprep.mubr.bf16.mxu0 0
    %348 = vmatmul.mubr.bf16.gmra.mxu0 %v305
    %v349 = vpop.f32.mrf.mxu0
    %v350 = vadd.f32 0.0, %v349
    %v351 = vpop.f32.mrf.mxu0
    %v352 = vpop.f32.mrf.mxu0
    %v353 = vpop.f32.mrf.mxu0
    %354 = vdwg.mxu0
    %v355 = vld [vmem:[%s2] sm:$0xff]
    %v356 = vld [vmem:[%s2 + $0x8] sm:$0xff]
    %v357 = vld [vmem:[%s2 + $0x10] sm:$0xff]
    %v358 = vpack.c.bf16 %v356, %v355
    %v359 = vpack.c.bf16 %v357, %v357
    %v360 = vld [vmem:[%s9] sm:$0xf]
    %v361 = vld [vmem:[%s9 + $0x4] sm:$0xf]
    %v362 = vld [vmem:[%s9 + $0x8] sm:$0xf]
    %v363 = vld [vmem:[%s9 + $0xc] sm:$0xf]
    %v368 = vunpack.c.l.b16 %v360
    %v369 = vunpack.c.l.b16 %v361
    %v370 = vunpack.c.l.b16 %v362
    %v371 = vunpack.c.l.b16 %v363
    %v372 = vpack.c.b16 %v369, %v368
    %v373 = vpack.c.b16 %v371, %v370
    %v377 = vsel %vm78, %v358, 0
    %v380 = vsel %vm78, %v359, 0
    %382 = vmatprep.subr.bf16.mxu0 0
    %383 = vmatpush1.bf16.msra.mxu0 0
    %384 = vmatprep.subr.bf16.mxu0 0
    %385 = vmatpush1.bf16.msra.mxu0 0
    %386 = vmatprep.subr.bf16.mxu0 0
    %387 = vmatpush1.bf16.msra.mxu0 0
    %388 = vmatprep.subr.bf16.mxu0 0
    %389 = vmatpush1.bf16.msra.mxu0 0
    %390 = vmatprep.subr.bf16.mxu0 0
    %391 = vmatpush1.bf16.msra.mxu0 0
    %392 = vmatprep.subr.bf16.mxu0 0
    %393 = vmatpush1.bf16.msra.mxu0 0
    %394 = vmatprep.subr.bf16.mxu0 0
    %395 = vmatpush1.bf16.msra.mxu0 %v373
    %396 = vmatprep.subr.bf16.mxu0 0
    %397 = vmatpush1.bf16.msra.mxu0 %v372
    %398 = vmatprep.subr.bf16.mxu0 0
    %399 = vmatpush2.bf16.msra.mxu0 0
    %400 = vmatprep.subr.bf16.mxu0 0
    %401 = vmatpush2.bf16.msra.mxu0 0
    %402 = vmatprep.subr.bf16.mxu0 0
    %403 = vmatpush2.bf16.msra.mxu0 0
    %404 = vmatprep.subr.bf16.mxu0 0
    %405 = vmatpush2.bf16.msra.mxu0 0
    %406 = vmatprep.subr.bf16.mxu0 0
    %407 = vmatpush2.bf16.msra.mxu0 0
    %408 = vmatprep.subr.bf16.mxu0 0
    %409 = vmatpush2.bf16.msra.mxu0 0
    %410 = vmatprep.subr.bf16.mxu0 0
    %411 = vmatpush2.bf16.msra.mxu0 0
    %412 = vmatprep.subr.bf16.mxu0 0
    %413 = vmatpush2.bf16.msra.mxu0 0
    %414 = vmatprep.mubr.bf16.mxu0 0
    %415 = vmatmul.mubr.bf16.gmra.mxu0 %v377
    %v416 = vpop.f32.mrf.mxu0
    %v417 = vadd.f32 0.0, %v416
    %v418 = vpop.f32.mrf.mxu0
    %v419 = vpop.f32.mrf.mxu0
    %v420 = vadd.f32 0.0, %v419
    %v421 = vpop.f32.mrf.mxu0
    %422 = vmatprep.mubr.bf16.mxu0 0
    %423 = vmatmul.mubr.bf16.gmra.mxu0 %v380
    %v424 = vpop.f32.mrf.mxu0
    %v425 = vadd.f32 0.0, %v424
    %v426 = vpop.f32.mrf.mxu0
    %v427 = vpop.f32.mrf.mxu0
    %v428 = vpop.f32.mrf.mxu0
    %429 = vdwg.mxu0
    %v430 = vmul.f32 %v342, %v417
    %v431 = vmul.f32 %v345, %v420
    %v432 = vmul.f32 %v350, %v425
    %v433 = vpack.c.bf16 %v431, %v430
    %v434 = vpack.c.bf16 %v432, %v432
    %v435 = vlaneseq
    %v436 = vshrl.u32 %v435, 7
    %v437 = vadd.s32 %v436, 8
    %v438 = vld [vmem:[%s4] sm:$0x1]
    %v439 = vlaneseq
    %v440 = vshrl.u32 %v439, 7
    %v441 = vsub.s32 0, %v440
    %v442 = vrot.slane %v438, %v441
    %vm443 = vcmp.eq.s32.totalorder %v436, %v442
    %vm444 = vcmp.eq.s32.totalorder %v437, %v442
    %v445 = vsel %vm443, 1, 0
    %v446 = vsel %vm444, 1, 0
    %v447 = vcvt.s32.f32 %v445
    %v448 = vcvt.s32.f32 %v446
    %v449 = vpack.c.bf16 %v448, %v447
    %vm450 = vcmask 195584
    %v452 = vsel %vm450, %v449, 0
    %v455 = vsel %vm143, %v434, 0
    %457 = vmatprep.subr.bf16.mxu0 0
    %458 = vmatpush1.bf16.msra.mxu0 0
    %459 = vmatprep.subr.bf16.mxu0 0
    %460 = vmatpush1.bf16.msra.mxu0 0
    %461 = vmatprep.subr.bf16.mxu0 0
    %462 = vmatpush1.bf16.msra.mxu0 0
    %463 = vmatprep.subr.bf16.mxu0 0
    %464 = vmatpush1.bf16.msra.mxu0 0
    %465 = vmatprep.subr.bf16.mxu0 0
    %466 = vmatpush1.bf16.msra.mxu0 0
    %467 = vmatprep.subr.bf16.mxu0 0
    %468 = vmatpush1.bf16.msra.mxu0 0
    %469 = vmatprep.subr.bf16.mxu0 0
    %470 = vmatpush1.bf16.msra.mxu0 %v455
    %471 = vmatprep.subr.bf16.mxu0 0
    %472 = vmatpush1.bf16.msra.mxu0 %v433
    %473 = vmatprep.subr.bf16.mxu0 0
    %474 = vmatpush2.bf16.msra.mxu0 0
    %475 = vmatprep.subr.bf16.mxu0 0
    %476 = vmatpush2.bf16.msra.mxu0 0
    %477 = vmatprep.subr.bf16.mxu0 0
    %478 = vmatpush2.bf16.msra.mxu0 0
    %479 = vmatprep.subr.bf16.mxu0 0
    %480 = vmatpush2.bf16.msra.mxu0 0
    %481 = vmatprep.subr.bf16.mxu0 0
    %482 = vmatpush2.bf16.msra.mxu0 0
    %483 = vmatprep.subr.bf16.mxu0 0
    %484 = vmatpush2.bf16.msra.mxu0 0
    %485 = vmatprep.subr.bf16.mxu0 0
    %486 = vmatpush2.bf16.msra.mxu0 0
    %487 = vmatprep.subr.bf16.mxu0 0
    %488 = vmatpush2.bf16.msra.mxu0 0
    %489 = vmatprep.mubr.bf16.mxu0 0
    %490 = vmatmul.mubr.bf16.gmra.mxu0 %v452
    %v491 = vpop.f32.mrf.mxu0
    %v492 = vadd.f32 0.0, %v491
    %v493 = vpop.f32.mrf.mxu0
    %v494 = vpop.f32.mrf.mxu0
    %v495 = vadd.f32 0.0, %v494
    %v496 = vpop.f32.mrf.mxu0
    %497 = vdwg.mxu0
    %v498 = vpack.c.bf16 %v495, %v492
    %v499 = vld [vmem:[%s10] sm:$0xf]
    %v500 = vld [vmem:[%s10 + $0x4] sm:$0xf]
    %v503 = vunpack.c.l.b16 %v499
    %v504 = vunpack.c.l.b16 %v500
    %v505 = vpack.c.b16 %v504, %v503
    %v508 = vsel %vm300, %v498, 0
    %510 = vmatprep.subr.bf16.mxu0 0
    %511 = vmatpush1.bf16.msra.mxu0 0
    %512 = vmatprep.subr.bf16.mxu0 0
    %513 = vmatpush1.bf16.msra.mxu0 0
    %514 = vmatprep.subr.bf16.mxu0 0
    %515 = vmatpush1.bf16.msra.mxu0 0
    %516 = vmatprep.subr.bf16.mxu0 0
    %517 = vmatpush1.bf16.msra.mxu0 0
    %518 = vmatprep.subr.bf16.mxu0 0
    %519 = vmatpush1.bf16.msra.mxu0 0
    %520 = vmatprep.subr.bf16.mxu0 0
    %521 = vmatpush1.bf16.msra.mxu0 0
    %522 = vmatprep.subr.bf16.mxu0 0
    %523 = vmatpush1.bf16.msra.mxu0 0
    %524 = vmatprep.subr.bf16.mxu0 0
    %525 = vmatpush1.bf16.msra.mxu0 %v505
    %526 = vmatprep.subr.bf16.mxu0 0
    %527 = vmatpush2.bf16.msra.mxu0 0
    %528 = vmatprep.subr.bf16.mxu0 0
    %529 = vmatpush2.bf16.msra.mxu0 0
    %530 = vmatprep.subr.bf16.mxu0 0
    %531 = vmatpush2.bf16.msra.mxu0 0
    %532 = vmatprep.subr.bf16.mxu0 0
    %533 = vmatpush2.bf16.msra.mxu0 0
    %534 = vmatprep.subr.bf16.mxu0 0
    %535 = vmatpush2.bf16.msra.mxu0 0
    %536 = vmatprep.subr.bf16.mxu0 0
    %537 = vmatpush2.bf16.msra.mxu0 0
    %538 = vmatprep.subr.bf16.mxu0 0
    %539 = vmatpush2.bf16.msra.mxu0 0
    %540 = vmatprep.subr.bf16.mxu0 0
    %541 = vmatpush2.bf16.msra.mxu0 0
    %542 = vmatprep.mubr.bf16.mxu0 0
    %543 = vmatmul.mubr.bf16.gmra.mxu0 %v508
    %v544 = vpop.f32.mrf.mxu0
    %v545 = vadd.f32 0.0, %v544
    %v546 = vpop.f32.mrf.mxu0
    %v547 = vpop.f32.mrf.mxu0
    %v548 = vadd.f32 0.0, %v547
    %v549 = vpop.f32.mrf.mxu0
    %550 = vdwg.mxu0
    %v551 = vsub.f32 0.0, %v545
    %v552 = vsub.f32 0.0, %v548
    %v553 = vmul.f32 %v551, 1.442695
    %v554 = vpow.pop %v553
    %v555 = vmul.f32 %v552, 1.442695
    %v556 = vpow.pop %v555
    %v557 = vadd.f32 %v554, 1.0
    %v558 = vadd.f32 %v556, 1.0
    %v559 = vrcp.pop %v557
    %v560 = vrcp.pop %v558
    %v561 = vmul.f32 %v545, %v559
    %v562 = vmul.f32 %v548, %v560
    %v563 = vadd.f32 %v133, %v561
    %v564 = vadd.f32 %v134, %v562
    %v565 = vpack.c.bf16 %v564, %v563
    %v566 = vld [vmem:[%s11] sm:$0xf]
    %v567 = vld [vmem:[%s11 + $0x4] sm:$0xf]
    %v568 = vld [vmem:[%s11 + $0x8] sm:$0xf]
    %v569 = vld [vmem:[%s11 + $0xc] sm:$0xf]
    %v570 = vld [vmem:[%s12] sm:$0x1]
    %v572 = vlaneseq
    %v573 = vshrl.u32 %v572, 7
    %v574 = vsub.s32 0, %v573
    %v575 = vrot.slane %v570, %v574
    %v581 = vunpack.c.l.b16 %v566
    %v582 = vunpack.c.l.b16 %v567
    %v583 = vunpack.c.l.b16 %v568
    %v584 = vunpack.c.l.b16 %v569
    %v585 = vpack.c.b16 %v582, %v581
    %v586 = vpack.c.b16 %v584, %v583
    %v590 = vsel %vm78, %v565, 0
    %592 = vmatprep.subr.bf16.mxu0 0
    %593 = vmatpush1.bf16.msra.mxu0 0
    %594 = vmatprep.subr.bf16.mxu0 0
    %595 = vmatpush1.bf16.msra.mxu0 0
    %596 = vmatprep.subr.bf16.mxu0 0
    %597 = vmatpush1.bf16.msra.mxu0 0
    %598 = vmatprep.subr.bf16.mxu0 0
    %599 = vmatpush1.bf16.msra.mxu0 0
    %600 = vmatprep.subr.bf16.mxu0 0
    %601 = vmatpush1.bf16.msra.mxu0 0
    %602 = vmatprep.subr.bf16.mxu0 0
    %603 = vmatpush1.bf16.msra.mxu0 0
    %604 = vmatprep.subr.bf16.mxu0 0
    %605 = vmatpush1.bf16.msra.mxu0 %v586
    %606 = vmatprep.subr.bf16.mxu0 0
    %607 = vmatpush1.bf16.msra.mxu0 %v585
    %608 = vmatprep.subr.bf16.mxu0 0
    %609 = vmatpush2.bf16.msra.mxu0 0
    %610 = vmatprep.subr.bf16.mxu0 0
    %611 = vmatpush2.bf16.msra.mxu0 0
    %612 = vmatprep.subr.bf16.mxu0 0
    %613 = vmatpush2.bf16.msra.mxu0 0
    %614 = vmatprep.subr.bf16.mxu0 0
    %615 = vmatpush2.bf16.msra.mxu0 0
    %616 = vmatprep.subr.bf16.mxu0 0
    %617 = vmatpush2.bf16.msra.mxu0 0
    %618 = vmatprep.subr.bf16.mxu0 0
    %619 = vmatpush2.bf16.msra.mxu0 0
    %620 = vmatprep.subr.bf16.mxu0 0
    %621 = vmatpush2.bf16.msra.mxu0 0
    %622 = vmatprep.subr.bf16.mxu0 0
    %623 = vmatpush2.bf16.msra.mxu0 0
    %624 = vmatprep.mubr.bf16.mxu0 0
    %625 = vmatmul.mubr.bf16.gmra.mxu0 %v590
    %v626 = vpop.f32.mrf.mxu0
    %v627 = vadd.f32 %v575, %v626
    %v628 = vpop.f32.mrf.mxu0
    %v629 = vpop.f32.mrf.mxu0
    %v630 = vadd.f32 %v575, %v629
    %v631 = vpop.f32.mrf.mxu0
    %632 = vdwg.mxu0
    %v633 = vsub.f32 0.0, %v627
    %v634 = vsub.f32 0.0, %v630
    %v635 = vmul.f32 %v633, 1.442695
    %v636 = vpow.pop %v635
    %v637 = vmul.f32 %v634, 1.442695
    %v638 = vpow.pop %v637
    %v639 = vadd.f32 %v636, 1.0
    %v640 = vadd.f32 %v638, 1.0
    %v641 = vrcp.pop %v639
    %v642 = vrcp.pop %v640
    %v643 = vmul.f32 %v627, %v641
    %v644 = vmul.f32 %v630, %v642
    %v645 = vpack.c.bf16 %v644, %v643
    %s646 = scalar_lea.vmem %s11, 16
    %v647 = vld [vmem:[%s646] sm:$0xf]
    %v648 = vld [vmem:[%s646 + $0x4] sm:$0xf]
    %v649 = vld [vmem:[%s646 + $0x8] sm:$0xf]
    %v650 = vld [vmem:[%s646 + $0xc] sm:$0xf]
    %s651 = scalar_lea.vmem %s12, 1
    %v652 = vld [vmem:[%s651] sm:$0x1]
    %v654 = vlaneseq
    %v655 = vshrl.u32 %v654, 7
    %v656 = vsub.s32 0, %v655
    %v657 = vrot.slane %v652, %v656
    %v663 = vunpack.c.l.b16 %v647
    %v664 = vunpack.c.l.b16 %v648
    %v665 = vunpack.c.l.b16 %v649
    %v666 = vunpack.c.l.b16 %v650
    %v667 = vpack.c.b16 %v664, %v663
    %v668 = vpack.c.b16 %v666, %v665
    %v672 = vsel %vm78, %v645, 0
    %674 = vmatprep.subr.bf16.mxu0 0
    %675 = vmatpush1.bf16.msra.mxu0 0
    %676 = vmatprep.subr.bf16.mxu0 0
    %677 = vmatpush1.bf16.msra.mxu0 0
    %678 = vmatprep.subr.bf16.mxu0 0
    %679 = vmatpush1.bf16.msra.mxu0 0
    %680 = vmatprep.subr.bf16.mxu0 0
    %681 = vmatpush1.bf16.msra.mxu0 0
    %682 = vmatprep.subr.bf16.mxu0 0
    %683 = vmatpush1.bf16.msra.mxu0 0
    %684 = vmatprep.subr.bf16.mxu0 0
    %685 = vmatpush1.bf16.msra.mxu0 0
    %686 = vmatprep.subr.bf16.mxu0 0
    %687 = vmatpush1.bf16.msra.mxu0 %v668
    %688 = vmatprep.subr.bf16.mxu0 0
    %689 = vmatpush1.bf16.msra.mxu0 %v667
    %690 = vmatprep.subr.bf16.mxu0 0
    %691 = vmatpush2.bf16.msra.mxu0 0
    %692 = vmatprep.subr.bf16.mxu0 0
    %693 = vmatpush2.bf16.msra.mxu0 0
    %694 = vmatprep.subr.bf16.mxu0 0
    %695 = vmatpush2.bf16.msra.mxu0 0
    %696 = vmatprep.subr.bf16.mxu0 0
    %697 = vmatpush2.bf16.msra.mxu0 0
    %698 = vmatprep.subr.bf16.mxu0 0
    %699 = vmatpush2.bf16.msra.mxu0 0
    %700 = vmatprep.subr.bf16.mxu0 0
    %701 = vmatpush2.bf16.msra.mxu0 0
    %702 = vmatprep.subr.bf16.mxu0 0
    %703 = vmatpush2.bf16.msra.mxu0 0
    %704 = vmatprep.subr.bf16.mxu0 0
    %705 = vmatpush2.bf16.msra.mxu0 0
    %706 = vmatprep.mubr.bf16.mxu0 0
    %707 = vmatmul.mubr.bf16.gmra.mxu0 %v672
    %v708 = vpop.f32.mrf.mxu0
    %v709 = vadd.f32 %v657, %v708
    %v710 = vpop.f32.mrf.mxu0
    %v711 = vpop.f32.mrf.mxu0
    %v712 = vadd.f32 %v657, %v711
    %v713 = vpop.f32.mrf.mxu0
    %714 = vdwg.mxu0
    %v715 = vsub.f32 0.0, %v709
    %v716 = vsub.f32 0.0, %v712
    %v717 = vmul.f32 %v715, 1.442695
    %v718 = vpow.pop %v717
    %v719 = vmul.f32 %v716, 1.442695
    %v720 = vpow.pop %v719
    %v721 = vadd.f32 %v718, 1.0
    %v722 = vadd.f32 %v720, 1.0
    %v723 = vrcp.pop %v721
    %v724 = vrcp.pop %v722
    %v725 = vmul.f32 %v709, %v723
    %v726 = vmul.f32 %v712, %v724
    %v727 = vadd.f32 %v563, %v725
    %v728 = vadd.f32 %v564, %v726
    %v729 = vpack.c.bf16 %v728, %v727
    %v730 = vld [vmem:[%s13] sm:$0xf]
    %v731 = vld [vmem:[%s13 + $0x4] sm:$0xf]
    %v732 = vld [vmem:[%s13 + $0x8] sm:$0xf]
    %v733 = vld [vmem:[%s13 + $0xc] sm:$0xf]
    %v734 = vld [vmem:[%s14] sm:$0x1]
    %v736 = vlaneseq
    %v737 = vshrl.u32 %v736, 7
    %v738 = vsub.s32 0, %v737
    %v739 = vrot.slane %v734, %v738
    %v745 = vunpack.c.l.b16 %v730
    %v746 = vunpack.c.l.b16 %v731
    %v747 = vunpack.c.l.b16 %v732
    %v748 = vunpack.c.l.b16 %v733
    %v749 = vpack.c.b16 %v746, %v745
    %v750 = vpack.c.b16 %v748, %v747
    %v754 = vsel %vm78, %v729, 0
    %756 = vmatprep.subr.bf16.mxu0 0
    %757 = vmatpush1.bf16.msra.mxu0 0
    %758 = vmatprep.subr.bf16.mxu0 0
    %759 = vmatpush1.bf16.msra.mxu0 0
    %760 = vmatprep.subr.bf16.mxu0 0
    %761 = vmatpush1.bf16.msra.mxu0 0
    %762 = vmatprep.subr.bf16.mxu0 0
    %763 = vmatpush1.bf16.msra.mxu0 0
    %764 = vmatprep.subr.bf16.mxu0 0
    %765 = vmatpush1.bf16.msra.mxu0 0
    %766 = vmatprep.subr.bf16.mxu0 0
    %767 = vmatpush1.bf16.msra.mxu0 0
    %768 = vmatprep.subr.bf16.mxu0 0
    %769 = vmatpush1.bf16.msra.mxu0 %v750
    %770 = vmatprep.subr.bf16.mxu0 0
    %771 = vmatpush1.bf16.msra.mxu0 %v749
    %772 = vmatprep.subr.bf16.mxu0 0
    %773 = vmatpush2.bf16.msra.mxu0 0
    %774 = vmatprep.subr.bf16.mxu0 0
    %775 = vmatpush2.bf16.msra.mxu0 0
    %776 = vmatprep.subr.bf16.mxu0 0
    %777 = vmatpush2.bf16.msra.mxu0 0
    %778 = vmatprep.subr.bf16.mxu0 0
    %779 = vmatpush2.bf16.msra.mxu0 0
    %780 = vmatprep.subr.bf16.mxu0 0
    %781 = vmatpush2.bf16.msra.mxu0 0
    %782 = vmatprep.subr.bf16.mxu0 0
    %783 = vmatpush2.bf16.msra.mxu0 0
    %784 = vmatprep.subr.bf16.mxu0 0
    %785 = vmatpush2.bf16.msra.mxu0 0
    %786 = vmatprep.subr.bf16.mxu0 0
    %787 = vmatpush2.bf16.msra.mxu0 0
    %788 = vmatprep.mubr.bf16.mxu0 0
    %789 = vmatmul.mubr.bf16.gmra.mxu0 %v754
    %v790 = vpop.f32.mrf.mxu0
    %v791 = vadd.f32 %v739, %v790
    %v792 = vpop.f32.mrf.mxu0
    %v793 = vpop.f32.mrf.mxu0
    %v794 = vadd.f32 %v739, %v793
    %v795 = vpop.f32.mrf.mxu0
    %796 = vdwg.mxu0
    %v797 = vsub.f32 0.0, %v791
    %v798 = vsub.f32 0.0, %v794
    %v799 = vmul.f32 %v797, 1.442695
    %v800 = vpow.pop %v799
    %v801 = vmul.f32 %v798, 1.442695
    %v802 = vpow.pop %v801
    %v803 = vadd.f32 %v800, 1.0
    %v804 = vadd.f32 %v802, 1.0
    %v805 = vrcp.pop %v803
    %v806 = vrcp.pop %v804
    %v807 = vmul.f32 %v791, %v805
    %v808 = vmul.f32 %v794, %v806
    %v809 = vadd.f32 %v807, %v52
    %v810 = vadd.f32 %v808, %v53
    %v811 = vpack.c.bf16 %v810, %v809
    %s812 = scalar_lea.vmem %s11, 32
    %v813 = vld [vmem:[%s812] sm:$0xf]
    %v814 = vld [vmem:[%s812 + $0x4] sm:$0xf]
    %v815 = vld [vmem:[%s812 + $0x8] sm:$0xf]
    %v816 = vld [vmem:[%s812 + $0xc] sm:$0xf]
    %s817 = scalar_lea.vmem %s12, 2
    %v818 = vld [vmem:[%s817] sm:$0x1]
    %v820 = vlaneseq
    %v821 = vshrl.u32 %v820, 7
    %v822 = vsub.s32 0, %v821
    %v823 = vrot.slane %v818, %v822
    %v829 = vunpack.c.l.b16 %v813
    %v830 = vunpack.c.l.b16 %v814
    %v831 = vunpack.c.l.b16 %v815
    %v832 = vunpack.c.l.b16 %v816
    %v833 = vpack.c.b16 %v830, %v829
    %v834 = vpack.c.b16 %v832, %v831
    %v838 = vsel %vm78, %v811, 0
    %840 = vmatprep.subr.bf16.mxu0 0
    %841 = vmatpush1.bf16.msra.mxu0 0
    %842 = vmatprep.subr.bf16.mxu0 0
    %843 = vmatpush1.bf16.msra.mxu0 0
    %844 = vmatprep.subr.bf16.mxu0 0
    %845 = vmatpush1.bf16.msra.mxu0 0
    %846 = vmatprep.subr.bf16.mxu0 0
    %847 = vmatpush1.bf16.msra.mxu0 0
    %848 = vmatprep.subr.bf16.mxu0 0
    %849 = vmatpush1.bf16.msra.mxu0 0
    %850 = vmatprep.subr.bf16.mxu0 0
    %851 = vmatpush1.bf16.msra.mxu0 0
    %852 = vmatprep.subr.bf16.mxu0 0
    %853 = vmatpush1.bf16.msra.mxu0 %v834
    %854 = vmatprep.subr.bf16.mxu0 0
    %855 = vmatpush1.bf16.msra.mxu0 %v833
    %856 = vmatprep.subr.bf16.mxu0 0
    %857 = vmatpush2.bf16.msra.mxu0 0
    %858 = vmatprep.subr.bf16.mxu0 0
    %859 = vmatpush2.bf16.msra.mxu0 0
    %860 = vmatprep.subr.bf16.mxu0 0
    %861 = vmatpush2.bf16.msra.mxu0 0
    %862 = vmatprep.subr.bf16.mxu0 0
    %863 = vmatpush2.bf16.msra.mxu0 0
    %864 = vmatprep.subr.bf16.mxu0 0
    %865 = vmatpush2.bf16.msra.mxu0 0
    %866 = vmatprep.subr.bf16.mxu0 0
    %867 = vmatpush2.bf16.msra.mxu0 0
    %868 = vmatprep.subr.bf16.mxu0 0
    %869 = vmatpush2.bf16.msra.mxu0 0
    %870 = vmatprep.subr.bf16.mxu0 0
    %871 = vmatpush2.bf16.msra.mxu0 0
    %872 = vmatprep.mubr.bf16.mxu0 0
    %873 = vmatmul.mubr.bf16.gmra.mxu0 %v838
    %v874 = vpop.f32.mrf.mxu0
    %v875 = vadd.f32 %v823, %v874
    %v876 = vpop.f32.mrf.mxu0
    %v877 = vpop.f32.mrf.mxu0
    %v878 = vadd.f32 %v823, %v877
    %v879 = vpop.f32.mrf.mxu0
    %880 = vdwg.mxu0
    %v881 = vsub.f32 0.0, %v875
    %v882 = vsub.f32 0.0, %v878
    %v883 = vmul.f32 %v881, 1.442695
    %v884 = vpow.pop %v883
    %v885 = vmul.f32 %v882, 1.442695
    %v886 = vpow.pop %v885
    %v887 = vadd.f32 %v884, 1.0
    %v888 = vadd.f32 %v886, 1.0
    %v889 = vrcp.pop %v887
    %v890 = vrcp.pop %v888
    %v891 = vmul.f32 %v875, %v889
    %v892 = vmul.f32 %v878, %v890
    %v893 = vpack.c.bf16 %v892, %v891
    %s894 = scalar_lea.vmem %s11, 48
    %v895 = vld [vmem:[%s894] sm:$0xf]
    %v896 = vld [vmem:[%s894 + $0x4] sm:$0xf]
    %v897 = vld [vmem:[%s894 + $0x8] sm:$0xf]
    %v898 = vld [vmem:[%s894 + $0xc] sm:$0xf]
    %s899 = scalar_lea.vmem %s12, 3
    %v900 = vld [vmem:[%s899] sm:$0x1]
    %v902 = vlaneseq
    %v903 = vshrl.u32 %v902, 7
    %v904 = vsub.s32 0, %v903
    %v905 = vrot.slane %v900, %v904
    %v911 = vunpack.c.l.b16 %v895
    %v912 = vunpack.c.l.b16 %v896
    %v913 = vunpack.c.l.b16 %v897
    %v914 = vunpack.c.l.b16 %v898
    %v915 = vpack.c.b16 %v912, %v911
    %v916 = vpack.c.b16 %v914, %v913
    %v920 = vsel %vm78, %v893, 0
    %922 = vmatprep.subr.bf16.mxu0 0
    %923 = vmatpush1.bf16.msra.mxu0 0
    %924 = vmatprep.subr.bf16.mxu0 0
    %925 = vmatpush1.bf16.msra.mxu0 0
    %926 = vmatprep.subr.bf16.mxu0 0
    %927 = vmatpush1.bf16.msra.mxu0 0
    %928 = vmatprep.subr.bf16.mxu0 0
    %929 = vmatpush1.bf16.msra.mxu0 0
    %930 = vmatprep.subr.bf16.mxu0 0
    %931 = vmatpush1.bf16.msra.mxu0 0
    %932 = vmatprep.subr.bf16.mxu0 0
    %933 = vmatpush1.bf16.msra.mxu0 0
    %934 = vmatprep.subr.bf16.mxu0 0
    %935 = vmatpush1.bf16.msra.mxu0 %v916
    %936 = vmatprep.subr.bf16.mxu0 0
    %937 = vmatpush1.bf16.msra.mxu0 %v915
    %938 = vmatprep.subr.bf16.mxu0 0
    %939 = vmatpush2.bf16.msra.mxu0 0
    %940 = vmatprep.subr.bf16.mxu0 0
    %941 = vmatpush2.bf16.msra.mxu0 0
    %942 = vmatprep.subr.bf16.mxu0 0
    %943 = vmatpush2.bf16.msra.mxu0 0
    %944 = vmatprep.subr.bf16.mxu0 0
    %945 = vmatpush2.bf16.msra.mxu0 0
    %946 = vmatprep.subr.bf16.mxu0 0
    %947 = vmatpush2.bf16.msra.mxu0 0
    %948 = vmatprep.subr.bf16.mxu0 0
    %949 = vmatpush2.bf16.msra.mxu0 0
    %950 = vmatprep.subr.bf16.mxu0 0
    %951 = vmatpush2.bf16.msra.mxu0 0
    %952 = vmatprep.subr.bf16.mxu0 0
    %953 = vmatpush2.bf16.msra.mxu0 0
    %954 = vmatprep.mubr.bf16.mxu0 0
    %955 = vmatmul.mubr.bf16.gmra.mxu0 %v920
    %v956 = vpop.f32.mrf.mxu0
    %v957 = vadd.f32 %v905, %v956
    %v958 = vpop.f32.mrf.mxu0
    %v959 = vpop.f32.mrf.mxu0
    %v960 = vadd.f32 %v905, %v959
    %v961 = vpop.f32.mrf.mxu0
    %962 = vdwg.mxu0
    %v963 = vsub.f32 0.0, %v957
    %v964 = vsub.f32 0.0, %v960
    %v965 = vmul.f32 %v963, 1.442695
    %v966 = vpow.pop %v965
    %v967 = vmul.f32 %v964, 1.442695
    %v968 = vpow.pop %v967
    %v969 = vadd.f32 %v966, 1.0
    %v970 = vadd.f32 %v968, 1.0
    %v971 = vrcp.pop %v969
    %v972 = vrcp.pop %v970
    %v973 = vmul.f32 %v957, %v971
    %v974 = vmul.f32 %v960, %v972
    %v975 = vadd.f32 %v809, %v973
    %v976 = vadd.f32 %v810, %v974
    %v977 = vpack.c.bf16 %v976, %v975
    %s978 = scalar_lea.vmem %s11, 64
    %v979 = vld [vmem:[%s978] sm:$0xf]
    %v980 = vld [vmem:[%s978 + $0x4] sm:$0xf]
    %v981 = vld [vmem:[%s978 + $0x8] sm:$0xf]
    %v982 = vld [vmem:[%s978 + $0xc] sm:$0xf]
    %s983 = scalar_lea.vmem %s12, 4
    %v984 = vld [vmem:[%s983] sm:$0x1]
    %v986 = vlaneseq
    %v987 = vshrl.u32 %v986, 7
    %v988 = vsub.s32 0, %v987
    %v989 = vrot.slane %v984, %v988
    %v995 = vunpack.c.l.b16 %v979
    %v996 = vunpack.c.l.b16 %v980
    %v997 = vunpack.c.l.b16 %v981
    %v998 = vunpack.c.l.b16 %v982
    %v999 = vpack.c.b16 %v996, %v995
    %v1000 = vpack.c.b16 %v998, %v997
    %v1004 = vsel %vm78, %v977, 0
    %1006 = vmatprep.subr.bf16.mxu0 0
    %1007 = vmatpush1.bf16.msra.mxu0 0
    %1008 = vmatprep.subr.bf16.mxu0 0
    %1009 = vmatpush1.bf16.msra.mxu0 0
    %1010 = vmatprep.subr.bf16.mxu0 0
    %1011 = vmatpush1.bf16.msra.mxu0 0
    %1012 = vmatprep.subr.bf16.mxu0 0
    %1013 = vmatpush1.bf16.msra.mxu0 0
    %1014 = vmatprep.subr.bf16.mxu0 0
    %1015 = vmatpush1.bf16.msra.mxu0 0
    %1016 = vmatprep.subr.bf16.mxu0 0
    %1017 = vmatpush1.bf16.msra.mxu0 0
    %1018 = vmatprep.subr.bf16.mxu0 0
    %1019 = vmatpush1.bf16.msra.mxu0 %v1000
    %1020 = vmatprep.subr.bf16.mxu0 0
    %1021 = vmatpush1.bf16.msra.mxu0 %v999
    %1022 = vmatprep.subr.bf16.mxu0 0
    %1023 = vmatpush2.bf16.msra.mxu0 0
    %1024 = vmatprep.subr.bf16.mxu0 0
    %1025 = vmatpush2.bf16.msra.mxu0 0
    %1026 = vmatprep.subr.bf16.mxu0 0
    %1027 = vmatpush2.bf16.msra.mxu0 0
    %1028 = vmatprep.subr.bf16.mxu0 0
    %1029 = vmatpush2.bf16.msra.mxu0 0
    %1030 = vmatprep.subr.bf16.mxu0 0
    %1031 = vmatpush2.bf16.msra.mxu0 0
    %1032 = vmatprep.subr.bf16.mxu0 0
    %1033 = vmatpush2.bf16.msra.mxu0 0
    %1034 = vmatprep.subr.bf16.mxu0 0
    %1035 = vmatpush2.bf16.msra.mxu0 0
    %1036 = vmatprep.subr.bf16.mxu0 0
    %1037 = vmatpush2.bf16.msra.mxu0 0
    %1038 = vmatprep.mubr.bf16.mxu0 0
    %1039 = vmatmul.mubr.bf16.gmra.mxu0 %v1004
    %v1040 = vpop.f32.mrf.mxu0
    %v1041 = vadd.f32 %v989, %v1040
    %v1042 = vpop.f32.mrf.mxu0
    %v1043 = vpop.f32.mrf.mxu0
    %v1044 = vadd.f32 %v989, %v1043
    %v1045 = vpop.f32.mrf.mxu0
    %1046 = vdwg.mxu0
    %v1047 = vsub.f32 0.0, %v1041
    %v1048 = vsub.f32 0.0, %v1044
    %v1049 = vmul.f32 %v1047, 1.442695
    %v1050 = vpow.pop %v1049
    %v1051 = vmul.f32 %v1048, 1.442695
    %v1052 = vpow.pop %v1051
    %v1053 = vadd.f32 %v1050, 1.0
    %v1054 = vadd.f32 %v1052, 1.0
    %v1055 = vrcp.pop %v1053
    %v1056 = vrcp.pop %v1054
    %v1057 = vmul.f32 %v1041, %v1055
    %v1058 = vmul.f32 %v1044, %v1056
    %v1059 = vpack.c.bf16 %v1058, %v1057
    %s1060 = scalar_lea.vmem %s11, 80
    %v1061 = vld [vmem:[%s1060] sm:$0xf]
    %v1062 = vld [vmem:[%s1060 + $0x4] sm:$0xf]
    %v1063 = vld [vmem:[%s1060 + $0x8] sm:$0xf]
    %v1064 = vld [vmem:[%s1060 + $0xc] sm:$0xf]
    %s1065 = scalar_lea.vmem %s12, 5
    %v1066 = vld [vmem:[%s1065] sm:$0x1]
    %v1068 = vlaneseq
    %v1069 = vshrl.u32 %v1068, 7
    %v1070 = vsub.s32 0, %v1069
    %v1071 = vrot.slane %v1066, %v1070
    %v1077 = vunpack.c.l.b16 %v1061
    %v1078 = vunpack.c.l.b16 %v1062
    %v1079 = vunpack.c.l.b16 %v1063
    %v1080 = vunpack.c.l.b16 %v1064
    %v1081 = vpack.c.b16 %v1078, %v1077
    %v1082 = vpack.c.b16 %v1080, %v1079
    %v1086 = vsel %vm78, %v1059, 0
    %1088 = vmatprep.subr.bf16.mxu0 0
    %1089 = vmatpush1.bf16.msra.mxu0 0
    %1090 = vmatprep.subr.bf16.mxu0 0
    %1091 = vmatpush1.bf16.msra.mxu0 0
    %1092 = vmatprep.subr.bf16.mxu0 0
    %1093 = vmatpush1.bf16.msra.mxu0 0
    %1094 = vmatprep.subr.bf16.mxu0 0
    %1095 = vmatpush1.bf16.msra.mxu0 0
    %1096 = vmatprep.subr.bf16.mxu0 0
    %1097 = vmatpush1.bf16.msra.mxu0 0
    %1098 = vmatprep.subr.bf16.mxu0 0
    %1099 = vmatpush1.bf16.msra.mxu0 0
    %1100 = vmatprep.subr.bf16.mxu0 0
    %1101 = vmatpush1.bf16.msra.mxu0 %v1082
    %1102 = vmatprep.subr.bf16.mxu0 0
    %1103 = vmatpush1.bf16.msra.mxu0 %v1081
    %1104 = vmatprep.subr.bf16.mxu0 0
    %1105 = vmatpush2.bf16.msra.mxu0 0
    %1106 = vmatprep.subr.bf16.mxu0 0
    %1107 = vmatpush2.bf16.msra.mxu0 0
    %1108 = vmatprep.subr.bf16.mxu0 0
    %1109 = vmatpush2.bf16.msra.mxu0 0
    %1110 = vmatprep.subr.bf16.mxu0 0
    %1111 = vmatpush2.bf16.msra.mxu0 0
    %1112 = vmatprep.subr.bf16.mxu0 0
    %1113 = vmatpush2.bf16.msra.mxu0 0
    %1114 = vmatprep.subr.bf16.mxu0 0
    %1115 = vmatpush2.bf16.msra.mxu0 0
    %1116 = vmatprep.subr.bf16.mxu0 0
    %1117 = vmatpush2.bf16.msra.mxu0 0
    %1118 = vmatprep.subr.bf16.mxu0 0
    %1119 = vmatpush2.bf16.msra.mxu0 0
    %1120 = vmatprep.mubr.bf16.mxu0 0
    %1121 = vmatmul.mubr.bf16.gmra.mxu0 %v1086
    %v1122 = vpop.f32.mrf.mxu0
    %v1123 = vadd.f32 %v1071, %v1122
    %v1124 = vpop.f32.mrf.mxu0
    %v1125 = vpop.f32.mrf.mxu0
    %v1126 = vadd.f32 %v1071, %v1125
    %v1127 = vpop.f32.mrf.mxu0
    %1128 = vdwg.mxu0
    %v1129 = vsub.f32 0.0, %v1123
    %v1130 = vsub.f32 0.0, %v1126
    %v1131 = vmul.f32 %v1129, 1.442695
    %v1132 = vpow.pop %v1131
    %v1133 = vmul.f32 %v1130, 1.442695
    %v1134 = vpow.pop %v1133
    %v1135 = vadd.f32 %v1132, 1.0
    %v1136 = vadd.f32 %v1134, 1.0
    %v1137 = vrcp.pop %v1135
    %v1138 = vrcp.pop %v1136
    %v1139 = vmul.f32 %v1123, %v1137
    %v1140 = vmul.f32 %v1126, %v1138
    %v1141 = vadd.f32 %v975, %v1139
    %v1142 = vadd.f32 %v976, %v1140
    %1143 = vst.msk [vmem:[#allocation2] sm:$0xff] %vm78, %v1141
    %1144 = vst.msk [vmem:[#allocation2 + $0x8] sm:$0xff] %vm78, %v1142
    // Predicated region
    $region62: #{interaction_pp_block.1} parent=1 // pred_check
      _
    $region63: #{interaction_pp_block.1} parent=1 // pred_check_branch
      %1146 = sbr.rel (0) target = $region65
    $region64: #{interaction_pp_block.1} parent=1 // pred_region
      %s1148 = ssub.s32 256, 256
      %1149 = vsyncadd [#allocation3], %s1148
      %s1150 = sshll.u32 [#allocation2], 4
      %s1151 = int_to_ptr.vmem [resolvable:$true] %s1150
      %1156 = dma.vmem_to_hbm [thread:$0]  %s1151, 256, %s15, [#allocation3], 128, 128, 8
    $region65: #{interaction_pp_block.1} parent=1 // pred_fallthru
      _
    // Predicated region
    $region66: #{interaction_pp_block.1} parent=1 // pred_check
      _
    $region67: #{interaction_pp_block.1} parent=1 // pred_check_branch
      %1158 = sbr.rel (0) target = $region69
    $region68: #{interaction_pp_block.1} parent=1 // pred_region
      %1159 = dma.done [#allocation3], 256
    $region69: #{interaction_pp_block.1} parent=1 // pred_fallthru
      _
    %1160 = vsyncpa [#allocation3], 1

</llo_original>
